<compile_context>
chip_gen: v6e
topology: v6e:2x2x1
jax: 0.10.0
libtpu: 0.0.40
codegen_flags: <defaults>
</compile_context>

<pallas_src>
import functools

import jax
import jax.numpy as jnp
from jax.experimental import pallas as pl
from jax.experimental.pallas import tpu as pltpu

LANE = 128      # lane width of a vreg
SUBLANE = 8     # sublane width of a vreg (f32)


def _round_up(x, m):
    return ((x + m - 1) // m) * m


def _rnn_kernel(emb_ref, wif_ref, whf_ref, bf_ref, wib_ref, bib_ref,
                wfc_ref, bfc_ref, soft_ref, logsoft_ref, *, T, Bp):
    """emb_ref: (T*Bp, E) bf16 time-major embeddings; weights pre-transposed,
    gate/lane/sublane padded in glue.  PyTorch gate order: i, f, g, o."""
    Hp = whf_ref.shape[0]                      # W_hh^T : (Hp, 4Hp)

    emb = emb_ref[...]                         # (T*Bp, E) bf16

    # ---- hoisted input projection: ONE big MXU matmul for all timesteps ----
    gx = (jnp.dot(emb, wif_ref[...], preferred_element_type=jnp.float32)
          + bf_ref[...])                       # (T*Bp, 4Hp) f32

    whf = whf_ref[...]                         # (Hp, 4Hp) bf16
    h = jnp.zeros((Bp, Hp), jnp.float32)
    c = jnp.zeros((Bp, Hp), jnp.float32)

    # ---- fully unrolled forward recurrence (T small & static) ----
    for t in range(T):
        g_t = gx[t * Bp:(t + 1) * Bp, :] + jnp.dot(
            h.astype(whf.dtype), whf, preferred_element_type=jnp.float32)
        # lane-aligned 128-wide gate slices (Hp == 128*k): no XLU shuffles
        i = jax.nn.sigmoid(g_t[:, 0 * Hp:1 * Hp])
        f = jax.nn.sigmoid(g_t[:, 1 * Hp:2 * Hp])
        g = jnp.tanh(g_t[:, 2 * Hp:3 * Hp])
        o = jax.nn.sigmoid(g_t[:, 3 * Hp:4 * Hp])
        c = f * c + i * g
        h = o * jnp.tanh(c)

    # ---- backward direction at t = T-1 (zero init => no recurrent term) ----
    gb = (jnp.dot(emb[(T - 1) * Bp:T * Bp, :], wib_ref[...],
                  preferred_element_type=jnp.float32) + bib_ref[...])
    ib = jax.nn.sigmoid(gb[:, 0 * Hp:1 * Hp])
    gg = jnp.tanh(gb[:, 2 * Hp:3 * Hp])
    ob = jax.nn.sigmoid(gb[:, 3 * Hp:4 * Hp])
    h_b = ob * jnp.tanh(ib * gg)

    # ---- fused fc + softmax / log_softmax over padded 128-lane output ----
    hid = jnp.concatenate([h, h_b], axis=1).astype(wfc_ref.dtype)   # (Bp, 2Hp)
    logits = (jnp.dot(hid, wfc_ref[...], preferred_element_type=jnp.float32)
              + bfc_ref[...])                  # (Bp, Op); pad lanes ~= -1e30
    m = jnp.max(logits, axis=1, keepdims=True)
    z = logits - m
    e = jnp.exp(z)                             # pad lanes underflow to 0
    s = jnp.sum(e, axis=1, keepdims=True)
    soft_ref[...] = e * pl.reciprocal(s, approx=True)
    logsoft_ref[...] = z - jnp.log(s)


def _pad_gate_cols(w, H, Hp):
    """(in_dim, 4H) -> (in_dim, 4Hp): zero-pad each of the 4 gate blocks."""
    in_dim = w.shape[0]
    w4 = w.reshape(in_dim, 4, H)
    return jnp.zeros((in_dim, 4, Hp), w.dtype).at[:, :, :H].set(w4).reshape(
        in_dim, 4 * Hp)


def init_params(key, x_dim, e_dim, h_dim, o_dim):
    ks = jax.random.split(key, 11)
    s = h_dim ** -0.5
    u = lambda k, shape, sc: jax.random.uniform(k, shape, jnp.float32, -sc, sc)

    Hp = _round_up(h_dim, LANE)
    Op = _round_up(o_dim, LANE)

    emb = jax.random.normal(ks[0], (x_dim, e_dim), jnp.float32) * 0.1
    emb = emb.at[0].set(0.0)                   # padding_idx=0 -> zero row

    # PyTorch-layout LSTM/Linear parameters
    w_ih_f = u(ks[1], (4 * h_dim, e_dim), s)
    w_hh_f = u(ks[2], (4 * h_dim, h_dim), s)
    b_f = u(ks[3], (4 * h_dim,), s) + u(ks[4], (4 * h_dim,), s)   # b_ih + b_hh
    w_ih_b = u(ks[5], (4 * h_dim, e_dim), s)
    _w_hh_b = u(ks[6], (4 * h_dim, h_dim), s)  # unused: backward h0 = 0
    b_b = u(ks[7], (4 * h_dim,), s) + u(ks[8], (4 * h_dim,), s)

    sf = (2 * h_dim) ** -0.5
    w_fc = u(ks[9], (o_dim, 2 * h_dim), sf)
    b_fc = u(ks[10], (o_dim,), sf)

    # ---- kernel layout: transposed, gate/lane padded, bf16 MXU operands ----
    wif = _pad_gate_cols(w_ih_f.T, h_dim, Hp).astype(jnp.bfloat16)  # (E, 4Hp)
    whf = jnp.zeros((Hp, 4 * Hp), jnp.float32).at[:h_dim].set(
        _pad_gate_cols(w_hh_f.T, h_dim, Hp)).astype(jnp.bfloat16)   # (Hp, 4Hp)
    bf = _pad_gate_cols(b_f[None, :], h_dim, Hp)                    # (1, 4Hp)
    wib = _pad_gate_cols(w_ih_b.T, h_dim, Hp).astype(jnp.bfloat16)
    bb = _pad_gate_cols(b_b[None, :], h_dim, Hp)

    w_fc_t = w_fc.T                                                  # (2H, O)
    wfc = jnp.zeros((2 * Hp, Op), jnp.float32)
    wfc = wfc.at[:h_dim, :o_dim].set(w_fc_t[:h_dim])                 # fwd half
    wfc = wfc.at[Hp:Hp + h_dim, :o_dim].set(w_fc_t[h_dim:])          # bwd half
    wfc = wfc.astype(jnp.bfloat16)
    bfc = jnp.full((1, Op), -1e30, jnp.float32).at[0, :o_dim].set(b_fc)

    return {
        "emb": emb.astype(jnp.bfloat16),
        "w_ih_f": wif, "w_hh_f": whf, "b_f": bf,
        "w_ih_b": wib, "b_b": bb,
        "w_fc": wfc, "b_fc": bfc,
        "o_dim": o_dim,
    }


def rnn_forward(x_tokens, params):
    B, T = x_tokens.shape
    Bp = _round_up(B, SUBLANE)
    Op = params["b_fc"].shape[-1]
    O = params["o_dim"]

    # Time-major gather in glue (pure indexing); pad batch with token 0 whose
    # embedding row is zero, so no (B,T,E) transpose is materialized in HBM.
    tok_tm = jnp.pad(jnp.transpose(x_tokens, (1, 0)), ((0, 0), (0, Bp - B)))
    emb2d = jnp.take(params["emb"], tok_tm, axis=0).reshape(T * Bp, -1)

    # nn.Dropout(0.2) is identity at inference time.
    # TODO(synk): training-mode dropout (random mask) not implemented.

    vmem = pl.BlockSpec(memory_space=pltpu.MemorySpace.VMEM)
    soft_p, logsoft_p = pl.pallas_call(
        functools.partial(_rnn_kernel, T=T, Bp=Bp),
        out_shape=(jax.ShapeDtypeStruct((Bp, Op), jnp.float32),
                   jax.ShapeDtypeStruct((Bp, Op), jnp.float32)),
        in_specs=[vmem] * 8,
        out_specs=(vmem, vmem),
    )(emb2d,
      params["w_ih_f"], params["w_hh_f"], params["b_f"],
      params["w_ih_b"], params["b_b"],
      params["w_fc"], params["b_fc"])
    # Strip the batch / output-lane padding added for tile alignment.
    return soft_p[:B, :O], logsoft_p[:B, :O]


if __name__ == "__main__":
    x_dim, e_dim, h_dim, o_dim = 50, 32, 32, 4
    B, T = 2, 8

    key = jax.random.PRNGKey(0)
    k_param, k_tok = jax.random.split(key)
    params = init_params(k_param, x_dim, e_dim, h_dim, o_dim)
    x_tokens = jax.random.randint(k_tok, (B, T), 0, x_dim, dtype=jnp.int32)

    soft, logsoft = rnn_forward(x_tokens, params)
    jax.block_until_ready((soft, logsoft))

    assert soft.shape == (B, o_dim) and logsoft.shape == (B, o_dim)
    assert bool(jnp.all(jnp.isfinite(soft)))
    assert bool(jnp.all(jnp.isfinite(logsoft)))
    print("KERNEL_OK")
</pallas_src>

<mosaic_0001>
module attributes {stable_mosaic.version = 11 : i64} {
  func.func @_rnn_kernel(%arg0: memref<64x32xbf16, #tpu.memory_space<vmem>>, %arg1: memref<32x512xbf16, #tpu.memory_space<vmem>>, %arg2: memref<128x512xbf16, #tpu.memory_space<vmem>>, %arg3: memref<1x512xf32, #tpu.memory_space<vmem>>, %arg4: memref<32x512xbf16, #tpu.memory_space<vmem>>, %arg5: memref<1x512xf32, #tpu.memory_space<vmem>>, %arg6: memref<256x128xbf16, #tpu.memory_space<vmem>>, %arg7: memref<1x128xf32, #tpu.memory_space<vmem>>, %arg8: memref<8x128xf32, #tpu.memory_space<vmem>>, %arg9: memref<8x128xf32, #tpu.memory_space<vmem>>) attributes {dimension_semantics = [], scalar_prefetch = 0 : i64, scratch_operands = 0 : i64, tpu.core_type = #tpu.core_type<tc>} {
    %c0 = arith.constant 0 : index
    %c0_0 = arith.constant 0 : index
    %0 = vector.load %arg0[%c0, %c0_0] : memref<64x32xbf16, #tpu.memory_space<vmem>>, vector<64x32xbf16>
    %c0_1 = arith.constant 0 : index
    %c0_2 = arith.constant 0 : index
    %1 = vector.load %arg1[%c0_1, %c0_2] : memref<32x512xbf16, #tpu.memory_space<vmem>>, vector<32x512xbf16>
    %cst = arith.constant dense<0.000000e+00> : vector<64x512xf32>
    %2 = tpu.matmul %0, %1, %cst {dimension_numbers = #tpu.dot_dimension_numbers<[1], [0], [0], [1], [0, 0, 1, 1], [], []>} : vector<64x32xbf16>, vector<32x512xbf16>, vector<64x512xf32> -> vector<64x512xf32>
    %c0_3 = arith.constant 0 : index
    %c0_4 = arith.constant 0 : index
    %3 = vector.load %arg3[%c0_3, %c0_4] : memref<1x512xf32, #tpu.memory_space<vmem>>, vector<1x512xf32>
    %4 = vector.broadcast %3 : vector<1x512xf32> to vector<64x512xf32>
    %5 = arith.addf %2, %4 : vector<64x512xf32>
    %c0_5 = arith.constant 0 : index
    %c0_6 = arith.constant 0 : index
    %6 = vector.load %arg2[%c0_5, %c0_6] : memref<128x512xbf16, #tpu.memory_space<vmem>>, vector<128x512xbf16>
    %cst_7 = arith.constant 0.000000e+00 : f32
    %7 = vector.broadcast %cst_7 : f32 to vector<8x128xf32>
    %cst_8 = arith.constant 0.000000e+00 : f32
    %8 = vector.broadcast %cst_8 : f32 to vector<8x128xf32>
    %9 = vector.extract_strided_slice %5 {offsets = [0, 0], sizes = [8, 512], strides = [1, 1]} : vector<64x512xf32> to vector<8x512xf32>
    %10 = arith.truncf %7 : vector<8x128xf32> to vector<8x128xbf16>
    %cst_9 = arith.constant dense<0.000000e+00> : vector<8x512xf32>
    %11 = tpu.matmul %10, %6, %cst_9 {dimension_numbers = #tpu.dot_dimension_numbers<[1], [0], [0], [1], [0, 0, 1, 1], [], []>} : vector<8x128xbf16>, vector<128x512xbf16>, vector<8x512xf32> -> vector<8x512xf32>
    %12 = arith.addf %9, %11 : vector<8x512xf32>
    %13 = vector.extract_strided_slice %12 {offsets = [0, 0], sizes = [8, 128], strides = [1, 1]} : vector<8x512xf32> to vector<8x128xf32>
    %14 = arith.negf %13 : vector<8x128xf32>
    %15 = math.exp %14 : vector<8x128xf32>
    %cst_10 = arith.constant 1.000000e+00 : f32
    %16 = vector.broadcast %cst_10 : f32 to vector<8x128xf32>
    %17 = arith.addf %16, %15 : vector<8x128xf32>
    %18 = arith.divf %16, %17 : vector<8x128xf32>
    %19 = vector.extract_strided_slice %12 {offsets = [0, 128], sizes = [8, 128], strides = [1, 1]} : vector<8x512xf32> to vector<8x128xf32>
    %20 = arith.negf %19 : vector<8x128xf32>
    %21 = math.exp %20 : vector<8x128xf32>
    %cst_11 = arith.constant 1.000000e+00 : f32
    %22 = vector.broadcast %cst_11 : f32 to vector<8x128xf32>
    %23 = arith.addf %22, %21 : vector<8x128xf32>
    %24 = arith.divf %22, %23 : vector<8x128xf32>
    %25 = vector.extract_strided_slice %12 {offsets = [0, 256], sizes = [8, 128], strides = [1, 1]} : vector<8x512xf32> to vector<8x128xf32>
    %26 = math.tanh %25 : vector<8x128xf32>
    %27 = vector.extract_strided_slice %12 {offsets = [0, 384], sizes = [8, 128], strides = [1, 1]} : vector<8x512xf32> to vector<8x128xf32>
    %28 = arith.negf %27 : vector<8x128xf32>
    %29 = math.exp %28 : vector<8x128xf32>
    %cst_12 = arith.constant 1.000000e+00 : f32
    %30 = vector.broadcast %cst_12 : f32 to vector<8x128xf32>
    %31 = arith.addf %30, %29 : vector<8x128xf32>
    %32 = arith.divf %30, %31 : vector<8x128xf32>
    %33 = arith.mulf %24, %8 : vector<8x128xf32>
    %34 = arith.mulf %18, %26 : vector<8x128xf32>
    %35 = arith.addf %33, %34 : vector<8x128xf32>
    %36 = math.tanh %35 : vector<8x128xf32>
    %37 = arith.mulf %32, %36 : vector<8x128xf32>
    %38 = vector.extract_strided_slice %5 {offsets = [8, 0], sizes = [8, 512], strides = [1, 1]} : vector<64x512xf32> to vector<8x512xf32>
    %39 = arith.truncf %37 : vector<8x128xf32> to vector<8x128xbf16>
    %cst_13 = arith.constant dense<0.000000e+00> : vector<8x512xf32>
    %40 = tpu.matmul %39, %6, %cst_13 {dimension_numbers = #tpu.dot_dimension_numbers<[1], [0], [0], [1], [0, 0, 1, 1], [], []>} : vector<8x128xbf16>, vector<128x512xbf16>, vector<8x512xf32> -> vector<8x512xf32>
    %41 = arith.addf %38, %40 : vector<8x512xf32>
    %42 = vector.extract_strided_slice %41 {offsets = [0, 0], sizes = [8, 128], strides = [1, 1]} : vector<8x512xf32> to vector<8x128xf32>
    %43 = arith.negf %42 : vector<8x128xf32>
    %44 = math.exp %43 : vector<8x128xf32>
    %cst_14 = arith.constant 1.000000e+00 : f32
    %45 = vector.broadcast %cst_14 : f32 to vector<8x128xf32>
    %46 = arith.addf %45, %44 : vector<8x128xf32>
    %47 = arith.divf %45, %46 : vector<8x128xf32>
    %48 = vector.extract_strided_slice %41 {offsets = [0, 128], sizes = [8, 128], strides = [1, 1]} : vector<8x512xf32> to vector<8x128xf32>
    %49 = arith.negf %48 : vector<8x128xf32>
    %50 = math.exp %49 : vector<8x128xf32>
    %cst_15 = arith.constant 1.000000e+00 : f32
    %51 = vector.broadcast %cst_15 : f32 to vector<8x128xf32>
    %52 = arith.addf %51, %50 : vector<8x128xf32>
    %53 = arith.divf %51, %52 : vector<8x128xf32>
    %54 = vector.extract_strided_slice %41 {offsets = [0, 256], sizes = [8, 128], strides = [1, 1]} : vector<8x512xf32> to vector<8x128xf32>
    %55 = math.tanh %54 : vector<8x128xf32>
    %56 = vector.extract_strided_slice %41 {offsets = [0, 384], sizes = [8, 128], strides = [1, 1]} : vector<8x512xf32> to vector<8x128xf32>
    %57 = arith.negf %56 : vector<8x128xf32>
    %58 = math.exp %57 : vector<8x128xf32>
    %cst_16 = arith.constant 1.000000e+00 : f32
    %59 = vector.broadcast %cst_16 : f32 to vector<8x128xf32>
    %60 = arith.addf %59, %58 : vector<8x128xf32>
    %61 = arith.divf %59, %60 : vector<8x128xf32>
    %62 = arith.mulf %53, %35 : vector<8x128xf32>
    %63 = arith.mulf %47, %55 : vector<8x128xf32>
    %64 = arith.addf %62, %63 : vector<8x128xf32>
    %65 = math.tanh %64 : vector<8x128xf32>
    %66 = arith.mulf %61, %65 : vector<8x128xf32>
    %67 = vector.extract_strided_slice %5 {offsets = [16, 0], sizes = [8, 512], strides = [1, 1]} : vector<64x512xf32> to vector<8x512xf32>
    %68 = arith.truncf %66 : vector<8x128xf32> to vector<8x128xbf16>
    %cst_17 = arith.constant dense<0.000000e+00> : vector<8x512xf32>
    %69 = tpu.matmul %68, %6, %cst_17 {dimension_numbers = #tpu.dot_dimension_numbers<[1], [0], [0], [1], [0, 0, 1, 1], [], []>} : vector<8x128xbf16>, vector<128x512xbf16>, vector<8x512xf32> -> vector<8x512xf32>
    %70 = arith.addf %67, %69 : vector<8x512xf32>
    %71 = vector.extract_strided_slice %70 {offsets = [0, 0], sizes = [8, 128], strides = [1, 1]} : vector<8x512xf32> to vector<8x128xf32>
    %72 = arith.negf %71 : vector<8x128xf32>
    %73 = math.exp %72 : vector<8x128xf32>
    %cst_18 = arith.constant 1.000000e+00 : f32
    %74 = vector.broadcast %cst_18 : f32 to vector<8x128xf32>
    %75 = arith.addf %74, %73 : vector<8x128xf32>
    %76 = arith.divf %74, %75 : vector<8x128xf32>
    %77 = vector.extract_strided_slice %70 {offsets = [0, 128], sizes = [8, 128], strides = [1, 1]} : vector<8x512xf32> to vector<8x128xf32>
    %78 = arith.negf %77 : vector<8x128xf32>
    %79 = math.exp %78 : vector<8x128xf32>
    %cst_19 = arith.constant 1.000000e+00 : f32
    %80 = vector.broadcast %cst_19 : f32 to vector<8x128xf32>
    %81 = arith.addf %80, %79 : vector<8x128xf32>
    %82 = arith.divf %80, %81 : vector<8x128xf32>
    %83 = vector.extract_strided_slice %70 {offsets = [0, 256], sizes = [8, 128], strides = [1, 1]} : vector<8x512xf32> to vector<8x128xf32>
    %84 = math.tanh %83 : vector<8x128xf32>
    %85 = vector.extract_strided_slice %70 {offsets = [0, 384], sizes = [8, 128], strides = [1, 1]} : vector<8x512xf32> to vector<8x128xf32>
    %86 = arith.negf %85 : vector<8x128xf32>
    %87 = math.exp %86 : vector<8x128xf32>
    %cst_20 = arith.constant 1.000000e+00 : f32
    %88 = vector.broadcast %cst_20 : f32 to vector<8x128xf32>
    %89 = arith.addf %88, %87 : vector<8x128xf32>
    %90 = arith.divf %88, %89 : vector<8x128xf32>
    %91 = arith.mulf %82, %64 : vector<8x128xf32>
    %92 = arith.mulf %76, %84 : vector<8x128xf32>
    %93 = arith.addf %91, %92 : vector<8x128xf32>
    %94 = math.tanh %93 : vector<8x128xf32>
    %95 = arith.mulf %90, %94 : vector<8x128xf32>
    %96 = vector.extract_strided_slice %5 {offsets = [24, 0], sizes = [8, 512], strides = [1, 1]} : vector<64x512xf32> to vector<8x512xf32>
    %97 = arith.truncf %95 : vector<8x128xf32> to vector<8x128xbf16>
    %cst_21 = arith.constant dense<0.000000e+00> : vector<8x512xf32>
    %98 = tpu.matmul %97, %6, %cst_21 {dimension_numbers = #tpu.dot_dimension_numbers<[1], [0], [0], [1], [0, 0, 1, 1], [], []>} : vector<8x128xbf16>, vector<128x512xbf16>, vector<8x512xf32> -> vector<8x512xf32>
    %99 = arith.addf %96, %98 : vector<8x512xf32>
    %100 = vector.extract_strided_slice %99 {offsets = [0, 0], sizes = [8, 128], strides = [1, 1]} : vector<8x512xf32> to vector<8x128xf32>
    %101 = arith.negf %100 : vector<8x128xf32>
    %102 = math.exp %101 : vector<8x128xf32>
    %cst_22 = arith.constant 1.000000e+00 : f32
    %103 = vector.broadcast %cst_22 : f32 to vector<8x128xf32>
    %104 = arith.addf %103, %102 : vector<8x128xf32>
    %105 = arith.divf %103, %104 : vector<8x128xf32>
    %106 = vector.extract_strided_slice %99 {offsets = [0, 128], sizes = [8, 128], strides = [1, 1]} : vector<8x512xf32> to vector<8x128xf32>
    %107 = arith.negf %106 : vector<8x128xf32>
    %108 = math.exp %107 : vector<8x128xf32>
    %cst_23 = arith.constant 1.000000e+00 : f32
    %109 = vector.broadcast %cst_23 : f32 to vector<8x128xf32>
    %110 = arith.addf %109, %108 : vector<8x128xf32>
    %111 = arith.divf %109, %110 : vector<8x128xf32>
    %112 = vector.extract_strided_slice %99 {offsets = [0, 256], sizes = [8, 128], strides = [1, 1]} : vector<8x512xf32> to vector<8x128xf32>
    %113 = math.tanh %112 : vector<8x128xf32>
    %114 = vector.extract_strided_slice %99 {offsets = [0, 384], sizes = [8, 128], strides = [1, 1]} : vector<8x512xf32> to vector<8x128xf32>
    %115 = arith.negf %114 : vector<8x128xf32>
    %116 = math.exp %115 : vector<8x128xf32>
    %cst_24 = arith.constant 1.000000e+00 : f32
    %117 = vector.broadcast %cst_24 : f32 to vector<8x128xf32>
    %118 = arith.addf %117, %116 : vector<8x128xf32>
    %119 = arith.divf %117, %118 : vector<8x128xf32>
    %120 = arith.mulf %111, %93 : vector<8x128xf32>
    %121 = arith.mulf %105, %113 : vector<8x128xf32>
    %122 = arith.addf %120, %121 : vector<8x128xf32>
    %123 = math.tanh %122 : vector<8x128xf32>
    %124 = arith.mulf %119, %123 : vector<8x128xf32>
    %125 = vector.extract_strided_slice %5 {offsets = [32, 0], sizes = [8, 512], strides = [1, 1]} : vector<64x512xf32> to vector<8x512xf32>
    %126 = arith.truncf %124 : vector<8x128xf32> to vector<8x128xbf16>
    %cst_25 = arith.constant dense<0.000000e+00> : vector<8x512xf32>
    %127 = tpu.matmul %126, %6, %cst_25 {dimension_numbers = #tpu.dot_dimension_numbers<[1], [0], [0], [1], [0, 0, 1, 1], [], []>} : vector<8x128xbf16>, vector<128x512xbf16>, vector<8x512xf32> -> vector<8x512xf32>
    %128 = arith.addf %125, %127 : vector<8x512xf32>
    %129 = vector.extract_strided_slice %128 {offsets = [0, 0], sizes = [8, 128], strides = [1, 1]} : vector<8x512xf32> to vector<8x128xf32>
    %130 = arith.negf %129 : vector<8x128xf32>
    %131 = math.exp %130 : vector<8x128xf32>
    %cst_26 = arith.constant 1.000000e+00 : f32
    %132 = vector.broadcast %cst_26 : f32 to vector<8x128xf32>
    %133 = arith.addf %132, %131 : vector<8x128xf32>
    %134 = arith.divf %132, %133 : vector<8x128xf32>
    %135 = vector.extract_strided_slice %128 {offsets = [0, 128], sizes = [8, 128], strides = [1, 1]} : vector<8x512xf32> to vector<8x128xf32>
    %136 = arith.negf %135 : vector<8x128xf32>
    %137 = math.exp %136 : vector<8x128xf32>
    %cst_27 = arith.constant 1.000000e+00 : f32
    %138 = vector.broadcast %cst_27 : f32 to vector<8x128xf32>
    %139 = arith.addf %138, %137 : vector<8x128xf32>
    %140 = arith.divf %138, %139 : vector<8x128xf32>
    %141 = vector.extract_strided_slice %128 {offsets = [0, 256], sizes = [8, 128], strides = [1, 1]} : vector<8x512xf32> to vector<8x128xf32>
    %142 = math.tanh %141 : vector<8x128xf32>
    %143 = vector.extract_strided_slice %128 {offsets = [0, 384], sizes = [8, 128], strides = [1, 1]} : vector<8x512xf32> to vector<8x128xf32>
    %144 = arith.negf %143 : vector<8x128xf32>
    %145 = math.exp %144 : vector<8x128xf32>
    %cst_28 = arith.constant 1.000000e+00 : f32
    %146 = vector.broadcast %cst_28 : f32 to vector<8x128xf32>
    %147 = arith.addf %146, %145 : vector<8x128xf32>
    %148 = arith.divf %146, %147 : vector<8x128xf32>
    %149 = arith.mulf %140, %122 : vector<8x128xf32>
    %150 = arith.mulf %134, %142 : vector<8x128xf32>
    %151 = arith.addf %149, %150 : vector<8x128xf32>
    %152 = math.tanh %151 : vector<8x128xf32>
    %153 = arith.mulf %148, %152 : vector<8x128xf32>
    %154 = vector.extract_strided_slice %5 {offsets = [40, 0], sizes = [8, 512], strides = [1, 1]} : vector<64x512xf32> to vector<8x512xf32>
    %155 = arith.truncf %153 : vector<8x128xf32> to vector<8x128xbf16>
    %cst_29 = arith.constant dense<0.000000e+00> : vector<8x512xf32>
    %156 = tpu.matmul %155, %6, %cst_29 {dimension_numbers = #tpu.dot_dimension_numbers<[1], [0], [0], [1], [0, 0, 1, 1], [], []>} : vector<8x128xbf16>, vector<128x512xbf16>, vector<8x512xf32> -> vector<8x512xf32>
    %157 = arith.addf %154, %156 : vector<8x512xf32>
    %158 = vector.extract_strided_slice %157 {offsets = [0, 0], sizes = [8, 128], strides = [1, 1]} : vector<8x512xf32> to vector<8x128xf32>
    %159 = arith.negf %158 : vector<8x128xf32>
    %160 = math.exp %159 : vector<8x128xf32>
    %cst_30 = arith.constant 1.000000e+00 : f32
    %161 = vector.broadcast %cst_30 : f32 to vector<8x128xf32>
    %162 = arith.addf %161, %160 : vector<8x128xf32>
    %163 = arith.divf %161, %162 : vector<8x128xf32>
    %164 = vector.extract_strided_slice %157 {offsets = [0, 128], sizes = [8, 128], strides = [1, 1]} : vector<8x512xf32> to vector<8x128xf32>
    %165 = arith.negf %164 : vector<8x128xf32>
    %166 = math.exp %165 : vector<8x128xf32>
    %cst_31 = arith.constant 1.000000e+00 : f32
    %167 = vector.broadcast %cst_31 : f32 to vector<8x128xf32>
    %168 = arith.addf %167, %166 : vector<8x128xf32>
    %169 = arith.divf %167, %168 : vector<8x128xf32>
    %170 = vector.extract_strided_slice %157 {offsets = [0, 256], sizes = [8, 128], strides = [1, 1]} : vector<8x512xf32> to vector<8x128xf32>
    %171 = math.tanh %170 : vector<8x128xf32>
    %172 = vector.extract_strided_slice %157 {offsets = [0, 384], sizes = [8, 128], strides = [1, 1]} : vector<8x512xf32> to vector<8x128xf32>
    %173 = arith.negf %172 : vector<8x128xf32>
    %174 = math.exp %173 : vector<8x128xf32>
    %cst_32 = arith.constant 1.000000e+00 : f32
    %175 = vector.broadcast %cst_32 : f32 to vector<8x128xf32>
    %176 = arith.addf %175, %174 : vector<8x128xf32>
    %177 = arith.divf %175, %176 : vector<8x128xf32>
    %178 = arith.mulf %169, %151 : vector<8x128xf32>
    %179 = arith.mulf %163, %171 : vector<8x128xf32>
    %180 = arith.addf %178, %179 : vector<8x128xf32>
    %181 = math.tanh %180 : vector<8x128xf32>
    %182 = arith.mulf %177, %181 : vector<8x128xf32>
    %183 = vector.extract_strided_slice %5 {offsets = [48, 0], sizes = [8, 512], strides = [1, 1]} : vector<64x512xf32> to vector<8x512xf32>
    %184 = arith.truncf %182 : vector<8x128xf32> to vector<8x128xbf16>
    %cst_33 = arith.constant dense<0.000000e+00> : vector<8x512xf32>
    %185 = tpu.matmul %184, %6, %cst_33 {dimension_numbers = #tpu.dot_dimension_numbers<[1], [0], [0], [1], [0, 0, 1, 1], [], []>} : vector<8x128xbf16>, vector<128x512xbf16>, vector<8x512xf32> -> vector<8x512xf32>
    %186 = arith.addf %183, %185 : vector<8x512xf32>
    %187 = vector.extract_strided_slice %186 {offsets = [0, 0], sizes = [8, 128], strides = [1, 1]} : vector<8x512xf32> to vector<8x128xf32>
    %188 = arith.negf %187 : vector<8x128xf32>
    %189 = math.exp %188 : vector<8x128xf32>
    %cst_34 = arith.constant 1.000000e+00 : f32
    %190 = vector.broadcast %cst_34 : f32 to vector<8x128xf32>
    %191 = arith.addf %190, %189 : vector<8x128xf32>
    %192 = arith.divf %190, %191 : vector<8x128xf32>
    %193 = vector.extract_strided_slice %186 {offsets = [0, 128], sizes = [8, 128], strides = [1, 1]} : vector<8x512xf32> to vector<8x128xf32>
    %194 = arith.negf %193 : vector<8x128xf32>
    %195 = math.exp %194 : vector<8x128xf32>
    %cst_35 = arith.constant 1.000000e+00 : f32
    %196 = vector.broadcast %cst_35 : f32 to vector<8x128xf32>
    %197 = arith.addf %196, %195 : vector<8x128xf32>
    %198 = arith.divf %196, %197 : vector<8x128xf32>
    %199 = vector.extract_strided_slice %186 {offsets = [0, 256], sizes = [8, 128], strides = [1, 1]} : vector<8x512xf32> to vector<8x128xf32>
    %200 = math.tanh %199 : vector<8x128xf32>
    %201 = vector.extract_strided_slice %186 {offsets = [0, 384], sizes = [8, 128], strides = [1, 1]} : vector<8x512xf32> to vector<8x128xf32>
    %202 = arith.negf %201 : vector<8x128xf32>
    %203 = math.exp %202 : vector<8x128xf32>
    %cst_36 = arith.constant 1.000000e+00 : f32
    %204 = vector.broadcast %cst_36 : f32 to vector<8x128xf32>
    %205 = arith.addf %204, %203 : vector<8x128xf32>
    %206 = arith.divf %204, %205 : vector<8x128xf32>
    %207 = arith.mulf %198, %180 : vector<8x128xf32>
    %208 = arith.mulf %192, %200 : vector<8x128xf32>
    %209 = arith.addf %207, %208 : vector<8x128xf32>
    %210 = math.tanh %209 : vector<8x128xf32>
    %211 = arith.mulf %206, %210 : vector<8x128xf32>
    %212 = vector.extract_strided_slice %5 {offsets = [56, 0], sizes = [8, 512], strides = [1, 1]} : vector<64x512xf32> to vector<8x512xf32>
    %213 = arith.truncf %211 : vector<8x128xf32> to vector<8x128xbf16>
    %cst_37 = arith.constant dense<0.000000e+00> : vector<8x512xf32>
    %214 = tpu.matmul %213, %6, %cst_37 {dimension_numbers = #tpu.dot_dimension_numbers<[1], [0], [0], [1], [0, 0, 1, 1], [], []>} : vector<8x128xbf16>, vector<128x512xbf16>, vector<8x512xf32> -> vector<8x512xf32>
    %215 = arith.addf %212, %214 : vector<8x512xf32>
    %216 = vector.extract_strided_slice %215 {offsets = [0, 0], sizes = [8, 128], strides = [1, 1]} : vector<8x512xf32> to vector<8x128xf32>
    %217 = arith.negf %216 : vector<8x128xf32>
    %218 = math.exp %217 : vector<8x128xf32>
    %cst_38 = arith.constant 1.000000e+00 : f32
    %219 = vector.broadcast %cst_38 : f32 to vector<8x128xf32>
    %220 = arith.addf %219, %218 : vector<8x128xf32>
    %221 = arith.divf %219, %220 : vector<8x128xf32>
    %222 = vector.extract_strided_slice %215 {offsets = [0, 128], sizes = [8, 128], strides = [1, 1]} : vector<8x512xf32> to vector<8x128xf32>
    %223 = arith.negf %222 : vector<8x128xf32>
    %224 = math.exp %223 : vector<8x128xf32>
    %cst_39 = arith.constant 1.000000e+00 : f32
    %225 = vector.broadcast %cst_39 : f32 to vector<8x128xf32>
    %226 = arith.addf %225, %224 : vector<8x128xf32>
    %227 = arith.divf %225, %226 : vector<8x128xf32>
    %228 = vector.extract_strided_slice %215 {offsets = [0, 256], sizes = [8, 128], strides = [1, 1]} : vector<8x512xf32> to vector<8x128xf32>
    %229 = math.tanh %228 : vector<8x128xf32>
    %230 = vector.extract_strided_slice %215 {offsets = [0, 384], sizes = [8, 128], strides = [1, 1]} : vector<8x512xf32> to vector<8x128xf32>
    %231 = arith.negf %230 : vector<8x128xf32>
    %232 = math.exp %231 : vector<8x128xf32>
    %cst_40 = arith.constant 1.000000e+00 : f32
    %233 = vector.broadcast %cst_40 : f32 to vector<8x128xf32>
    %234 = arith.addf %233, %232 : vector<8x128xf32>
    %235 = arith.divf %233, %234 : vector<8x128xf32>
    %236 = arith.mulf %227, %209 : vector<8x128xf32>
    %237 = arith.mulf %221, %229 : vector<8x128xf32>
    %238 = arith.addf %236, %237 : vector<8x128xf32>
    %239 = math.tanh %238 : vector<8x128xf32>
    %240 = arith.mulf %235, %239 : vector<8x128xf32>
    %241 = vector.extract_strided_slice %0 {offsets = [56, 0], sizes = [8, 32], strides = [1, 1]} : vector<64x32xbf16> to vector<8x32xbf16>
    %c0_41 = arith.constant 0 : index
    %c0_42 = arith.constant 0 : index
    %242 = vector.load %arg4[%c0_41, %c0_42] : memref<32x512xbf16, #tpu.memory_space<vmem>>, vector<32x512xbf16>
    %cst_43 = arith.constant dense<0.000000e+00> : vector<8x512xf32>
    %243 = tpu.matmul %241, %242, %cst_43 {dimension_numbers = #tpu.dot_dimension_numbers<[1], [0], [0], [1], [0, 0, 1, 1], [], []>} : vector<8x32xbf16>, vector<32x512xbf16>, vector<8x512xf32> -> vector<8x512xf32>
    %c0_44 = arith.constant 0 : index
    %c0_45 = arith.constant 0 : index
    %244 = vector.load %arg5[%c0_44, %c0_45] : memref<1x512xf32, #tpu.memory_space<vmem>>, vector<1x512xf32>
    %245 = vector.broadcast %244 : vector<1x512xf32> to vector<8x512xf32>
    %246 = arith.addf %243, %245 : vector<8x512xf32>
    %247 = vector.extract_strided_slice %246 {offsets = [0, 0], sizes = [8, 128], strides = [1, 1]} : vector<8x512xf32> to vector<8x128xf32>
    %248 = arith.negf %247 : vector<8x128xf32>
    %249 = math.exp %248 : vector<8x128xf32>
    %cst_46 = arith.constant 1.000000e+00 : f32
    %250 = vector.broadcast %cst_46 : f32 to vector<8x128xf32>
    %251 = arith.addf %250, %249 : vector<8x128xf32>
    %252 = arith.divf %250, %251 : vector<8x128xf32>
    %253 = vector.extract_strided_slice %246 {offsets = [0, 256], sizes = [8, 128], strides = [1, 1]} : vector<8x512xf32> to vector<8x128xf32>
    %254 = math.tanh %253 : vector<8x128xf32>
    %255 = vector.extract_strided_slice %246 {offsets = [0, 384], sizes = [8, 128], strides = [1, 1]} : vector<8x512xf32> to vector<8x128xf32>
    %256 = arith.negf %255 : vector<8x128xf32>
    %257 = math.exp %256 : vector<8x128xf32>
    %cst_47 = arith.constant 1.000000e+00 : f32
    %258 = vector.broadcast %cst_47 : f32 to vector<8x128xf32>
    %259 = arith.addf %258, %257 : vector<8x128xf32>
    %260 = arith.divf %258, %259 : vector<8x128xf32>
    %261 = arith.mulf %252, %254 : vector<8x128xf32>
    %262 = math.tanh %261 : vector<8x128xf32>
    %263 = arith.mulf %260, %262 : vector<8x128xf32>
    %264 = tpu.concatenate %240, %263 in 1 : vector<8x128xf32>, vector<8x128xf32> -> vector<8x256xf32>
    %265 = arith.truncf %264 : vector<8x256xf32> to vector<8x256xbf16>
    %c0_48 = arith.constant 0 : index
    %c0_49 = arith.constant 0 : index
    %266 = vector.load %arg6[%c0_48, %c0_49] : memref<256x128xbf16, #tpu.memory_space<vmem>>, vector<256x128xbf16>
    %cst_50 = arith.constant dense<0.000000e+00> : vector<8x128xf32>
    %267 = tpu.matmul %265, %266, %cst_50 {dimension_numbers = #tpu.dot_dimension_numbers<[1], [0], [0], [1], [0, 0, 1, 1], [], []>} : vector<8x256xbf16>, vector<256x128xbf16>, vector<8x128xf32> -> vector<8x128xf32>
    %c0_51 = arith.constant 0 : index
    %c0_52 = arith.constant 0 : index
    %268 = vector.load %arg7[%c0_51, %c0_52] : memref<1x128xf32, #tpu.memory_space<vmem>>, vector<1x128xf32>
    %269 = vector.broadcast %268 : vector<1x128xf32> to vector<8x128xf32>
    %270 = arith.addf %267, %269 : vector<8x128xf32>
    %cst_53 = arith.constant dense<0xFF800000> : vector<8xf32>
    %271 = vector.multi_reduction <maximumf>, %270, %cst_53 [1] : vector<8x128xf32> to vector<8xf32>
    %272 = vector.shape_cast %271 : vector<8xf32> to vector<8x1xf32>
    %273 = vector.broadcast %272 : vector<8x1xf32> to vector<8x128xf32>
    %274 = arith.subf %270, %273 : vector<8x128xf32>
    %275 = math.exp %274 : vector<8x128xf32>
    %cst_54 = arith.constant dense<0.000000e+00> : vector<8xf32>
    %276 = vector.multi_reduction <add>, %275, %cst_54 [1] : vector<8x128xf32> to vector<8xf32>
    %277 = vector.shape_cast %276 : vector<8xf32> to vector<8x1xf32>
    %278 = tpu.reciprocal %277 {approx = true} : vector<8x1xf32> -> vector<8x1xf32>
    %279 = vector.broadcast %278 : vector<8x1xf32> to vector<8x128xf32>
    %280 = arith.mulf %275, %279 : vector<8x128xf32>
    %c0_55 = arith.constant 0 : index
    %c0_56 = arith.constant 0 : index
    %281 = vector.load %arg8[%c0_55, %c0_56] : memref<8x128xf32, #tpu.memory_space<vmem>>, vector<8x128xf32>
    tpu.vector_store %arg8[%c0_55, %c0_56], %280 {strides = array<i32>} : memref<8x128xf32, #tpu.memory_space<vmem>>, vector<8x128xf32>,
    %282 = math.log %277 : vector<8x1xf32>
    %283 = vector.broadcast %282 : vector<8x1xf32> to vector<8x128xf32>
    %284 = arith.subf %274, %283 : vector<8x128xf32>
    %c0_57 = arith.constant 0 : index
    %c0_58 = arith.constant 0 : index
    %285 = vector.load %arg9[%c0_57, %c0_58] : memref<8x128xf32, #tpu.memory_space<vmem>>, vector<8x128xf32>
    tpu.vector_store %arg9[%c0_57, %c0_58], %284 {strides = array<i32>} : memref<8x128xf32, #tpu.memory_space<vmem>>, vector<8x128xf32>,
    return
  }
}

</mosaic_0001>

<llo_original>
// kernel: tpu_custom_call.1
$region0: #{tpu_custom_call.1}
  #allocation0 [shape = 'u32[]', space=smem, size = 0x4, offset = 0x4, fixed_abs, tag = 'smem constant byte address 0x4 - core index']
  #allocation1 [shape = 'u32[144,128]{1,0:T(1,128)}', space=vmem, size = 0x12000, scoped, tag = 'internal scratch']
  %s0 = inlined_call_operand.vmem [shape: bf16[64,32], index: 0, kind: input, shape index: {}]
  %s1 = inlined_call_operand.hbm [shape: bf16[32,512], index: 1, kind: input, shape index: {}]
  %s2 = inlined_call_operand.hbm [shape: bf16[128,512], index: 2, kind: input, shape index: {}]
  %s3 = inlined_call_operand.vmem [shape: f32[1,512], index: 3, kind: input, shape index: {}]
  %s4 = inlined_call_operand.hbm [shape: bf16[32,512], index: 4, kind: input, shape index: {}]
  %s5 = inlined_call_operand.vmem [shape: f32[1,512], index: 5, kind: input, shape index: {}]
  %s6 = inlined_call_operand.hbm [shape: bf16[256,128], index: 6, kind: input, shape index: {}]
  %s7 = inlined_call_operand.vmem [shape: f32[1,128], index: 7, kind: input, shape index: {}]
  %s8 = inlined_call_operand.hbm [shape: f32[8,128], index: 8, kind: output, shape index: {0}]
  %s9 = inlined_call_operand.hbm [shape: f32[8,128], index: 9, kind: output, shape index: {1}]
  %10 = xla_tuple %s8, %s9
  %s11 = sld [smem:[#allocation0]]
  $region66: #{tpu_custom_call.1} parent=0
    _
  %s13 = ssub.s32 1, %s11
  %s14 = scalar_select 0, %s13, %s11
  $region1: #{tpu_custom_call.1} parent=0
    #allocation2 [shape = 'u8[32768]{0}', space=vmem, size = 0x8000, scoped, tag = 'input window, operand 1, single buffered']
    #allocation3 [shape = 's32[1]{0}', space=sflag, size = 0x4, scoped, tag = 'scoped memory for tpu_custom_call.1']
    #allocation4 [shape = 's32[1]{0}', space=sflag, size = 0x4, scoped, tag = 'scoped memory for tpu_custom_call.1']
    #allocation5 [shape = 'u8[131072]{0}', space=vmem, size = 0x20000, scoped, tag = 'input window, operand 2, single buffered']
    #allocation6 [shape = 's32[1]{0}', space=sflag, size = 0x4, scoped, tag = 'scoped memory for tpu_custom_call.1']
    #allocation7 [shape = 'u8[32768]{0}', space=vmem, size = 0x8000, scoped, tag = 'input window, operand 4, single buffered']
    #allocation8 [shape = 'u8[65536]{0}', space=vmem, size = 0x10000, scoped, tag = 'input window, operand 6, single buffered']
    #allocation9 [shape = 's32[1]{0}', space=sflag, size = 0x4, scoped, tag = 'scoped memory for tpu_custom_call.1']
    #allocation10 [shape = 'u8[4096]{0}', space=vmem, size = 0x1000, scoped, tag = 'output window, operand 0, single buffered']
    #allocation11 [shape = 'u8[4096]{0}', space=vmem, size = 0x1000, scoped, tag = 'output window, operand 1, single buffered']
    #allocation12 [shape = 's32[1]{0}', space=sflag, size = 0x4, scoped, tag = 'scoped memory for tpu_custom_call.1']
    %15 = vsyncpa [#allocation3], 0
    %16 = vsyncpa [#allocation6], 0
    %17 = vsyncpa [#allocation9], 0
    %18 = vsyncpa [#allocation4], 0
    %19 = vsyncpa [#allocation12], 0
    // Predicated region
    $region2: #{tpu_custom_call.1} parent=1 // pred_check
      _
    $region3: #{tpu_custom_call.1} parent=1 // pred_check_branch
      %21 = sbr.rel (0) target = $region5
    $region4: #{tpu_custom_call.1} parent=1 // pred_region
      _
    $region5: #{tpu_custom_call.1} parent=1 // pred_fallthru
      _
    // Predicated region
    $region6: #{tpu_custom_call.1} parent=1 // pred_check
      _
    $region7: #{tpu_custom_call.1} parent=1 // pred_check_branch
      %23 = sbr.rel (0) target = $region9
    $region8: #{tpu_custom_call.1} parent=1 // pred_region
      %s25 = ssub.s32 1024, 1024
      %26 = vsyncadd [#allocation3], %s25
      %s27 = sshll.u32 [#allocation2], 4
      %s28 = int_to_ptr.vmem [resolvable:$true] %s27
      %33 = dma.hbm_to_vmem [thread:$0]  %s1, 1024, %s28, [#allocation3], 256, 256, 16
    $region9: #{tpu_custom_call.1} parent=1 // pred_fallthru
      _
    // Predicated region
    $region10: #{tpu_custom_call.1} parent=1 // pred_check
      _
    $region11: #{tpu_custom_call.1} parent=1 // pred_check_branch
      %35 = sbr.rel (0) target = $region13
    $region12: #{tpu_custom_call.1} parent=1 // pred_region
      %s37 = ssub.s32 4096, 4096
      %38 = vsyncadd [#allocation6], %s37
      %s39 = sshll.u32 [#allocation5], 4
      %s40 = int_to_ptr.vmem [resolvable:$true] %s39
      %45 = dma.hbm_to_vmem [thread:$0]  %s2, 4096, %s40, [#allocation6], 256, 256, 16
    $region13: #{tpu_custom_call.1} parent=1 // pred_fallthru
      _
    // Predicated region
    $region14: #{tpu_custom_call.1} parent=1 // pred_check
      _
    $region15: #{tpu_custom_call.1} parent=1 // pred_check_branch
      %47 = sbr.rel (0) target = $region17
    $region16: #{tpu_custom_call.1} parent=1 // pred_region
      _
    $region17: #{tpu_custom_call.1} parent=1 // pred_fallthru
      _
    // Predicated region
    $region18: #{tpu_custom_call.1} parent=1 // pred_check
      _
    $region19: #{tpu_custom_call.1} parent=1 // pred_check_branch
      %49 = sbr.rel (0) target = $region21
    $region20: #{tpu_custom_call.1} parent=1 // pred_region
      %s51 = ssub.s32 1024, 1024
      %52 = vsyncadd [#allocation6], %s51
      %s53 = sshll.u32 [#allocation7], 4
      %s54 = int_to_ptr.vmem [resolvable:$true] %s53
      %59 = dma.hbm_to_vmem [thread:$0]  %s4, 1024, %s54, [#allocation6], 256, 256, 16
    $region21: #{tpu_custom_call.1} parent=1 // pred_fallthru
      _
    // Predicated region
    $region22: #{tpu_custom_call.1} parent=1 // pred_check
      _
    $region23: #{tpu_custom_call.1} parent=1 // pred_check_branch
      %61 = sbr.rel (0) target = $region25
    $region24: #{tpu_custom_call.1} parent=1 // pred_region
      _
    $region25: #{tpu_custom_call.1} parent=1 // pred_fallthru
      _
    // Predicated region
    $region26: #{tpu_custom_call.1} parent=1 // pred_check
      _
    $region27: #{tpu_custom_call.1} parent=1 // pred_check_branch
      %63 = sbr.rel (0) target = $region29
    $region28: #{tpu_custom_call.1} parent=1 // pred_region
      %s65 = ssub.s32 2048, 2048
      %66 = vsyncadd [#allocation9], %s65
      %s67 = sshll.u32 [#allocation8], 4
      %s68 = int_to_ptr.vmem [resolvable:$true] %s67
      %73 = dma.hbm_to_vmem [thread:$0]  %s6, 2048, %s68, [#allocation9], 64, 64, 4
    $region29: #{tpu_custom_call.1} parent=1 // pred_fallthru
      _
    // Predicated region
    $region30: #{tpu_custom_call.1} parent=1 // pred_check
      _
    $region31: #{tpu_custom_call.1} parent=1 // pred_check_branch
      %75 = sbr.rel (0) target = $region33
    $region32: #{tpu_custom_call.1} parent=1 // pred_region
      _
    $region33: #{tpu_custom_call.1} parent=1 // pred_fallthru
      _
    // Predicated region
    $region34: #{tpu_custom_call.1} parent=1 // pred_check
      _
    $region35: #{tpu_custom_call.1} parent=1 // pred_check_branch
      %77 = sbr.rel (0) target = $region37
    $region36: #{tpu_custom_call.1} parent=1 // pred_region
      %78 = dma.done [#allocation3], 1024
    $region37: #{tpu_custom_call.1} parent=1 // pred_fallthru
      _
    // Predicated region
    $region38: #{tpu_custom_call.1} parent=1 // pred_check
      _
    $region39: #{tpu_custom_call.1} parent=1 // pred_check_branch
      %80 = sbr.rel (0) target = $region41
    $region40: #{tpu_custom_call.1} parent=1 // pred_region
      %81 = dma.done [#allocation6], 4096
    $region41: #{tpu_custom_call.1} parent=1 // pred_fallthru
      _
    // Predicated region
    $region42: #{tpu_custom_call.1} parent=1 // pred_check
      _
    $region43: #{tpu_custom_call.1} parent=1 // pred_check_branch
      %83 = sbr.rel (0) target = $region45
    $region44: #{tpu_custom_call.1} parent=1 // pred_region
      %84 = dma.done [#allocation6], 1024
    $region45: #{tpu_custom_call.1} parent=1 // pred_fallthru
      _
    // Predicated region
    $region46: #{tpu_custom_call.1} parent=1 // pred_check
      _
    $region47: #{tpu_custom_call.1} parent=1 // pred_check_branch
      %86 = sbr.rel (0) target = $region49
    $region48: #{tpu_custom_call.1} parent=1 // pred_region
      %87 = dma.done [#allocation9], 2048
    $region49: #{tpu_custom_call.1} parent=1 // pred_fallthru
      _
    %v89 = vld [vmem:[%s0] sm:$0xf]
    %v90 = vld [vmem:[%s0 + $0x4] sm:$0xf]
    %v91 = vld [vmem:[%s0 + $0x8] sm:$0xf]
    %v92 = vld [vmem:[%s0 + $0xc] sm:$0xf]
    %v93 = vld [vmem:[%s0 + $0x10] sm:$0xf]
    %v94 = vld [vmem:[%s0 + $0x14] sm:$0xf]
    %v95 = vld [vmem:[%s0 + $0x18] sm:$0xf]
    %v96 = vld [vmem:[%s0 + $0x1c] sm:$0xf]
    %v97 = vld [vmem:[#allocation2] sm:$0xff]
    %v98 = vld [vmem:[#allocation2 + $0x8] sm:$0xff]
    %v99 = vld [vmem:[#allocation2 + $0x10] sm:$0xff]
    %v100 = vld [vmem:[#allocation2 + $0x18] sm:$0xff]
    %v101 = vld [vmem:[#allocation2 + $0x20] sm:$0xff]
    %v102 = vld [vmem:[#allocation2 + $0x28] sm:$0xff]
    %v103 = vld [vmem:[#allocation2 + $0x30] sm:$0xff]
    %v104 = vld [vmem:[#allocation2 + $0x38] sm:$0xff]
    %v105 = vld [vmem:[%s3] sm:$0xf]
    %v107 = vlaneseq
    %v108 = vshrl.u32 %v107, 7
    %v109 = vsub.s32 0, %v108
    %v110 = vrot.slane %v105, %v109
    %v111 = vlaneseq
    %v112 = vshrl.u32 %v111, 7
    %v113 = vsub.s32 1, %v112
    %v114 = vrot.slane %v105, %v113
    %v115 = vlaneseq
    %v116 = vshrl.u32 %v115, 7
    %v117 = vsub.s32 2, %v116
    %v118 = vrot.slane %v105, %v117
    %v119 = vlaneseq
    %v120 = vshrl.u32 %v119, 7
    %v121 = vsub.s32 3, %v120
    %v122 = vrot.slane %v105, %v121
    %v135 = vunpack.c.l.b16 %v89
    %v136 = vunpack.c.l.b16 %v90
    %v137 = vunpack.c.l.b16 %v91
    %v138 = vunpack.c.l.b16 %v92
    %v139 = vunpack.c.l.b16 %v93
    %v140 = vunpack.c.l.b16 %v94
    %v141 = vunpack.c.l.b16 %v95
    %v142 = vunpack.c.l.b16 %v96
    %v143 = vpack.c.b16 %v136, %v135
    %v144 = vpack.c.b16 %v138, %v137
    %v145 = vpack.c.b16 %v140, %v139
    %v146 = vpack.c.b16 %v142, %v141
    %v155 = vunpack.c.l.b16 %v97
    %v156 = vunpack.c.h.b16 %v97
    %v157 = vunpack.c.l.b16 %v98
    %v158 = vunpack.c.h.b16 %v98
    %v159 = vunpack.c.l.b16 %v99
    %v160 = vunpack.c.h.b16 %v99
    %v161 = vunpack.c.l.b16 %v100
    %v162 = vunpack.c.h.b16 %v100
    %v163 = vunpack.c.l.b16 %v101
    %v164 = vunpack.c.h.b16 %v101
    %v165 = vunpack.c.l.b16 %v102
    %v166 = vunpack.c.h.b16 %v102
    %v167 = vunpack.c.l.b16 %v103
    %v168 = vunpack.c.h.b16 %v103
    %v169 = vunpack.c.l.b16 %v104
    %v170 = vunpack.c.h.b16 %v104
    %v171 = vpack.c.b16 %v159, %v155
    %v172 = vpack.c.b16 %v160, %v156
    %v173 = vpack.c.b16 %v161, %v157
    %v174 = vpack.c.b16 %v162, %v158
    %v175 = vpack.c.b16 %v167, %v163
    %v176 = vpack.c.b16 %v168, %v164
    %v177 = vpack.c.b16 %v169, %v165
    %v178 = vpack.c.b16 %v170, %v166
    %vm187 = vcmask 261120
    %v189 = vsel %vm187, %v143, 0
    %v192 = vsel %vm187, %v144, 0
    %v195 = vsel %vm187, %v145, 0
    %v198 = vsel %vm187, %v146, 0
    %200 = vmatprep.subr.bf16.mxu0 0
    %201 = vmatpush1.bf16.msra.mxu0 0
    %202 = vmatprep.subr.bf16.mxu0 0
    %203 = vmatpush1.bf16.msra.mxu0 0
    %204 = vmatprep.subr.bf16.mxu0 0
    %205 = vmatpush1.bf16.msra.mxu0 0
    %206 = vmatprep.subr.bf16.mxu0 0
    %207 = vmatpush1.bf16.msra.mxu0 0
    %208 = vmatprep.subr.bf16.mxu0 0
    %209 = vmatpush1.bf16.msra.mxu0 0
    %210 = vmatprep.subr.bf16.mxu0 0
    %211 = vmatpush1.bf16.msra.mxu0 0
    %212 = vmatprep.subr.bf16.mxu0 %v176
    %213 = vmatpush1.bf16.msra.mxu0 %v175
    %214 = vmatprep.subr.bf16.mxu0 %v172
    %215 = vmatpush1.bf16.msra.mxu0 %v171
    %216 = vmatprep.subr.bf16.mxu0 0
    %217 = vmatpush2.bf16.msra.mxu0 0
    %218 = vmatprep.subr.bf16.mxu0 0
    %219 = vmatpush2.bf16.msra.mxu0 0
    %220 = vmatprep.subr.bf16.mxu0 0
    %221 = vmatpush2.bf16.msra.mxu0 0
    %222 = vmatprep.subr.bf16.mxu0 0
    %223 = vmatpush2.bf16.msra.mxu0 0
    %224 = vmatprep.subr.bf16.mxu0 0
    %225 = vmatpush2.bf16.msra.mxu0 0
    %226 = vmatprep.subr.bf16.mxu0 0
    %227 = vmatpush2.bf16.msra.mxu0 0
    %228 = vmatprep.subr.bf16.mxu0 0
    %229 = vmatpush2.bf16.msra.mxu0 0
    %230 = vmatprep.subr.bf16.mxu0 0
    %231 = vmatpush2.bf16.msra.mxu0 0
    %232 = vmatprep.mubr.bf16.mxu0 0
    %233 = vmatmul.mubr.bf16.gmra.mxu0 %v189
    %v234 = vpop.f32.mrf.mxu0
    %v235 = vadd.f32 %v110, %v234
    %v236 = vpop.f32.mrf.mxu0
    %v237 = vadd.f32 %v114, %v236
    %v238 = vpop.f32.mrf.mxu0
    %v239 = vadd.f32 %v110, %v238
    %v240 = vpop.f32.mrf.mxu0
    %v241 = vadd.f32 %v114, %v240
    %242 = vmatprep.mubr.bf16.mxu0 0
    %243 = vmatmul.mubr.bf16.gmra.mxu0 %v192
    %v244 = vpop.f32.mrf.mxu0
    %v245 = vadd.f32 %v110, %v244
    %v246 = vpop.f32.mrf.mxu0
    %v247 = vadd.f32 %v114, %v246
    %v248 = vpop.f32.mrf.mxu0
    %v249 = vadd.f32 %v110, %v248
    %v250 = vpop.f32.mrf.mxu0
    %v251 = vadd.f32 %v114, %v250
    %252 = vmatprep.mubr.bf16.mxu0 0
    %253 = vmatmul.mubr.bf16.gmra.mxu0 %v195
    %v254 = vpop.f32.mrf.mxu0
    %v255 = vadd.f32 %v110, %v254
    %v256 = vpop.f32.mrf.mxu0
    %v257 = vadd.f32 %v114, %v256
    %v258 = vpop.f32.mrf.mxu0
    %v259 = vadd.f32 %v110, %v258
    %v260 = vpop.f32.mrf.mxu0
    %v261 = vadd.f32 %v114, %v260
    %262 = vmatprep.mubr.bf16.mxu0 0
    %263 = vmatmul.mubr.bf16.gmra.mxu0 %v198
    %v264 = vpop.f32.mrf.mxu0
    %v265 = vadd.f32 %v110, %v264
    %v266 = vpop.f32.mrf.mxu0
    %v267 = vadd.f32 %v114, %v266
    %v268 = vpop.f32.mrf.mxu0
    %v269 = vadd.f32 %v110, %v268
    %v270 = vpop.f32.mrf.mxu0
    %v271 = vadd.f32 %v114, %v270
    %272 = vdwg.mxu0
    %273 = vmatprep.subr.bf16.mxu0 0
    %274 = vmatpush1.bf16.msra.mxu0 0
    %275 = vmatprep.subr.bf16.mxu0 0
    %276 = vmatpush1.bf16.msra.mxu0 0
    %277 = vmatprep.subr.bf16.mxu0 0
    %278 = vmatpush1.bf16.msra.mxu0 0
    %279 = vmatprep.subr.bf16.mxu0 0
    %280 = vmatpush1.bf16.msra.mxu0 0
    %281 = vmatprep.subr.bf16.mxu0 0
    %282 = vmatpush1.bf16.msra.mxu0 0
    %283 = vmatprep.subr.bf16.mxu0 0
    %284 = vmatpush1.bf16.msra.mxu0 0
    %285 = vmatprep.subr.bf16.mxu0 %v178
    %286 = vmatpush1.bf16.msra.mxu0 %v177
    %287 = vmatprep.subr.bf16.mxu0 %v174
    %288 = vmatpush1.bf16.msra.mxu0 %v173
    %289 = vmatprep.subr.bf16.mxu0 0
    %290 = vmatpush2.bf16.msra.mxu0 0
    %291 = vmatprep.subr.bf16.mxu0 0
    %292 = vmatpush2.bf16.msra.mxu0 0
    %293 = vmatprep.subr.bf16.mxu0 0
    %294 = vmatpush2.bf16.msra.mxu0 0
    %295 = vmatprep.subr.bf16.mxu0 0
    %296 = vmatpush2.bf16.msra.mxu0 0
    %297 = vmatprep.subr.bf16.mxu0 0
    %298 = vmatpush2.bf16.msra.mxu0 0
    %299 = vmatprep.subr.bf16.mxu0 0
    %300 = vmatpush2.bf16.msra.mxu0 0
    %301 = vmatprep.subr.bf16.mxu0 0
    %302 = vmatpush2.bf16.msra.mxu0 0
    %303 = vmatprep.subr.bf16.mxu0 0
    %304 = vmatpush2.bf16.msra.mxu0 0
    %305 = vmatprep.mubr.bf16.mxu0 0
    %306 = vmatmul.mubr.bf16.gmra.mxu0 %v189
    %v307 = vpop.f32.mrf.mxu0
    %v308 = vadd.f32 %v118, %v307
    %v309 = vpop.f32.mrf.mxu0
    %v310 = vadd.f32 %v122, %v309
    %v311 = vpop.f32.mrf.mxu0
    %v312 = vadd.f32 %v118, %v311
    %v313 = vpop.f32.mrf.mxu0
    %v314 = vadd.f32 %v122, %v313
    %315 = vmatprep.mubr.bf16.mxu0 0
    %316 = vmatmul.mubr.bf16.gmra.mxu0 %v192
    %v317 = vpop.f32.mrf.mxu0
    %v318 = vadd.f32 %v118, %v317
    %v319 = vpop.f32.mrf.mxu0
    %v320 = vadd.f32 %v122, %v319
    %v321 = vpop.f32.mrf.mxu0
    %v322 = vadd.f32 %v118, %v321
    %v323 = vpop.f32.mrf.mxu0
    %v324 = vadd.f32 %v122, %v323
    %325 = vmatprep.mubr.bf16.mxu0 0
    %326 = vmatmul.mubr.bf16.gmra.mxu0 %v195
    %v327 = vpop.f32.mrf.mxu0
    %v328 = vadd.f32 %v118, %v327
    %v329 = vpop.f32.mrf.mxu0
    %v330 = vadd.f32 %v122, %v329
    %v331 = vpop.f32.mrf.mxu0
    %v332 = vadd.f32 %v118, %v331
    %v333 = vpop.f32.mrf.mxu0
    %v334 = vadd.f32 %v122, %v333
    %335 = vmatprep.mubr.bf16.mxu0 0
    %336 = vmatmul.mubr.bf16.gmra.mxu0 %v198
    %v337 = vpop.f32.mrf.mxu0
    %v338 = vadd.f32 %v118, %v337
    %v339 = vpop.f32.mrf.mxu0
    %v340 = vadd.f32 %v122, %v339
    %v341 = vpop.f32.mrf.mxu0
    %v342 = vadd.f32 %v118, %v341
    %v343 = vpop.f32.mrf.mxu0
    %v344 = vadd.f32 %v122, %v343
    %345 = vdwg.mxu0
    %v346 = vld [vmem:[#allocation5] sm:$0xff]
    %v347 = vld [vmem:[#allocation5 + $0x8] sm:$0xff]
    %v348 = vld [vmem:[#allocation5 + $0x10] sm:$0xff]
    %v349 = vld [vmem:[#allocation5 + $0x18] sm:$0xff]
    %v350 = vld [vmem:[#allocation5 + $0x20] sm:$0xff]
    %v351 = vld [vmem:[#allocation5 + $0x28] sm:$0xff]
    %v352 = vld [vmem:[#allocation5 + $0x30] sm:$0xff]
    %v353 = vld [vmem:[#allocation5 + $0x38] sm:$0xff]
    %v354 = vld [vmem:[#allocation5 + $0x40] sm:$0xff]
    %v355 = vld [vmem:[#allocation5 + $0x48] sm:$0xff]
    %v356 = vld [vmem:[#allocation5 + $0x50] sm:$0xff]
    %v357 = vld [vmem:[#allocation5 + $0x58] sm:$0xff]
    %v358 = vld [vmem:[#allocation5 + $0x60] sm:$0xff]
    %v359 = vld [vmem:[#allocation5 + $0x68] sm:$0xff]
    %v360 = vld [vmem:[#allocation5 + $0x70] sm:$0xff]
    %v361 = vld [vmem:[#allocation5 + $0x78] sm:$0xff]
    %v362 = vld [vmem:[#allocation5 + $0x80] sm:$0xff]
    %v363 = vld [vmem:[#allocation5 + $0x88] sm:$0xff]
    %v364 = vld [vmem:[#allocation5 + $0x90] sm:$0xff]
    %v365 = vld [vmem:[#allocation5 + $0x98] sm:$0xff]
    %v366 = vld [vmem:[#allocation5 + $0xa0] sm:$0xff]
    %v367 = vld [vmem:[#allocation5 + $0xa8] sm:$0xff]
    %v368 = vld [vmem:[#allocation5 + $0xb0] sm:$0xff]
    %v369 = vld [vmem:[#allocation5 + $0xb8] sm:$0xff]
    %v370 = vld [vmem:[#allocation5 + $0xc0] sm:$0xff]
    %v371 = vld [vmem:[#allocation5 + $0xc8] sm:$0xff]
    %v372 = vld [vmem:[#allocation5 + $0xd0] sm:$0xff]
    %v373 = vld [vmem:[#allocation5 + $0xd8] sm:$0xff]
    %v374 = vld [vmem:[#allocation5 + $0xe0] sm:$0xff]
    %v375 = vld [vmem:[#allocation5 + $0xe8] sm:$0xff]
    %v376 = vld [vmem:[#allocation5 + $0xf0] sm:$0xff]
    %v377 = vld [vmem:[#allocation5 + $0xf8] sm:$0xff]
    %v410 = vunpack.c.l.b16 %v346
    %v411 = vunpack.c.h.b16 %v346
    %v412 = vunpack.c.l.b16 %v347
    %v413 = vunpack.c.h.b16 %v347
    %v414 = vunpack.c.l.b16 %v348
    %v415 = vunpack.c.h.b16 %v348
    %v416 = vunpack.c.l.b16 %v349
    %v417 = vunpack.c.h.b16 %v349
    %v418 = vunpack.c.l.b16 %v350
    %v419 = vunpack.c.h.b16 %v350
    %v420 = vunpack.c.l.b16 %v351
    %v421 = vunpack.c.h.b16 %v351
    %v422 = vunpack.c.l.b16 %v352
    %v423 = vunpack.c.h.b16 %v352
    %v424 = vunpack.c.l.b16 %v353
    %v425 = vunpack.c.h.b16 %v353
    %v426 = vunpack.c.l.b16 %v354
    %v427 = vunpack.c.h.b16 %v354
    %v428 = vunpack.c.l.b16 %v355
    %v429 = vunpack.c.h.b16 %v355
    %v430 = vunpack.c.l.b16 %v356
    %v431 = vunpack.c.h.b16 %v356
    %v432 = vunpack.c.l.b16 %v357
    %v433 = vunpack.c.h.b16 %v357
    %v434 = vunpack.c.l.b16 %v358
    %v435 = vunpack.c.h.b16 %v358
    %v436 = vunpack.c.l.b16 %v359
    %v437 = vunpack.c.h.b16 %v359
    %v438 = vunpack.c.l.b16 %v360
    %v439 = vunpack.c.h.b16 %v360
    %v440 = vunpack.c.l.b16 %v361
    %v441 = vunpack.c.h.b16 %v361
    %v442 = vunpack.c.l.b16 %v362
    %v443 = vunpack.c.h.b16 %v362
    %v444 = vunpack.c.l.b16 %v363
    %v445 = vunpack.c.h.b16 %v363
    %v446 = vunpack.c.l.b16 %v364
    %v447 = vunpack.c.h.b16 %v364
    %v448 = vunpack.c.l.b16 %v365
    %v449 = vunpack.c.h.b16 %v365
    %v450 = vunpack.c.l.b16 %v366
    %v451 = vunpack.c.h.b16 %v366
    %v452 = vunpack.c.l.b16 %v367
    %v453 = vunpack.c.h.b16 %v367
    %v454 = vunpack.c.l.b16 %v368
    %v455 = vunpack.c.h.b16 %v368
    %v456 = vunpack.c.l.b16 %v369
    %v457 = vunpack.c.h.b16 %v369
    %v458 = vunpack.c.l.b16 %v370
    %v459 = vunpack.c.h.b16 %v370
    %v460 = vunpack.c.l.b16 %v371
    %v461 = vunpack.c.h.b16 %v371
    %v462 = vunpack.c.l.b16 %v372
    %v463 = vunpack.c.h.b16 %v372
    %v464 = vunpack.c.l.b16 %v373
    %v465 = vunpack.c.h.b16 %v373
    %v466 = vunpack.c.l.b16 %v374
    %v467 = vunpack.c.h.b16 %v374
    %v468 = vunpack.c.l.b16 %v375
    %v469 = vunpack.c.h.b16 %v375
    %v470 = vunpack.c.l.b16 %v376
    %v471 = vunpack.c.h.b16 %v376
    %v472 = vunpack.c.l.b16 %v377
    %v473 = vunpack.c.h.b16 %v377
    %v474 = vpack.c.b16 %v414, %v410
    %v475 = vpack.c.b16 %v415, %v411
    %v476 = vpack.c.b16 %v416, %v412
    %v477 = vpack.c.b16 %v417, %v413
    %v478 = vpack.c.b16 %v422, %v418
    %v479 = vpack.c.b16 %v423, %v419
    %v480 = vpack.c.b16 %v424, %v420
    %v481 = vpack.c.b16 %v425, %v421
    %v482 = vpack.c.b16 %v430, %v426
    %v483 = vpack.c.b16 %v431, %v427
    %v484 = vpack.c.b16 %v432, %v428
    %v485 = vpack.c.b16 %v433, %v429
    %v486 = vpack.c.b16 %v438, %v434
    %v487 = vpack.c.b16 %v439, %v435
    %v488 = vpack.c.b16 %v440, %v436
    %v489 = vpack.c.b16 %v441, %v437
    %v490 = vpack.c.b16 %v446, %v442
    %v491 = vpack.c.b16 %v447, %v443
    %v492 = vpack.c.b16 %v448, %v444
    %v493 = vpack.c.b16 %v449, %v445
    %v494 = vpack.c.b16 %v454, %v450
    %v495 = vpack.c.b16 %v455, %v451
    %v496 = vpack.c.b16 %v456, %v452
    %v497 = vpack.c.b16 %v457, %v453
    %v498 = vpack.c.b16 %v462, %v458
    %v499 = vpack.c.b16 %v463, %v459
    %v500 = vpack.c.b16 %v464, %v460
    %v501 = vpack.c.b16 %v465, %v461
    %v502 = vpack.c.b16 %v470, %v466
    %v503 = vpack.c.b16 %v471, %v467
    %v504 = vpack.c.b16 %v472, %v468
    %v505 = vpack.c.b16 %v473, %v469
    %538 = vmatprep.subr.bf16.mxu0 %v503
    %539 = vmatpush1.bf16.msra.mxu0 %v502
    %540 = vmatprep.subr.bf16.mxu0 %v499
    %541 = vmatpush1.bf16.msra.mxu0 %v498
    %542 = vmatprep.subr.bf16.mxu0 %v495
    %543 = vmatpush1.bf16.msra.mxu0 %v494
    %544 = vmatprep.subr.bf16.mxu0 %v491
    %545 = vmatpush1.bf16.msra.mxu0 %v490
    %546 = vmatprep.subr.bf16.mxu0 %v487
    %547 = vmatpush1.bf16.msra.mxu0 %v486
    %548 = vmatprep.subr.bf16.mxu0 %v483
    %549 = vmatpush1.bf16.msra.mxu0 %v482
    %550 = vmatprep.subr.bf16.mxu0 %v479
    %551 = vmatpush1.bf16.msra.mxu0 %v478
    %552 = vmatprep.subr.bf16.mxu0 %v475
    %553 = vmatpush1.bf16.msra.mxu0 %v474
    %554 = vmatprep.subr.bf16.mxu0 0
    %555 = vmatpush2.bf16.msra.mxu0 0
    %556 = vmatprep.subr.bf16.mxu0 0
    %557 = vmatpush2.bf16.msra.mxu0 0
    %558 = vmatprep.subr.bf16.mxu0 0
    %559 = vmatpush2.bf16.msra.mxu0 0
    %560 = vmatprep.subr.bf16.mxu0 0
    %561 = vmatpush2.bf16.msra.mxu0 0
    %562 = vmatprep.subr.bf16.mxu0 0
    %563 = vmatpush2.bf16.msra.mxu0 0
    %564 = vmatprep.subr.bf16.mxu0 0
    %565 = vmatpush2.bf16.msra.mxu0 0
    %566 = vmatprep.subr.bf16.mxu0 0
    %567 = vmatpush2.bf16.msra.mxu0 0
    %568 = vmatprep.subr.bf16.mxu0 0
    %569 = vmatpush2.bf16.msra.mxu0 0
    %570 = vmatprep.mubr.bf16.mxu0 0
    %571 = vmatmul.mubr.bf16.gmra.mxu0 0
    %v572 = vpop.f32.mrf.mxu0
    %v573 = vadd.f32 0.0, %v572
    %v574 = vpop.f32.mrf.mxu0
    %v575 = vadd.f32 0.0, %v574
    %v576 = vpop.f32.mrf.mxu0
    %v577 = vpop.f32.mrf.mxu0
    %578 = vdwg.mxu0
    %579 = vmatprep.subr.bf16.mxu0 %v505
    %580 = vmatpush1.bf16.msra.mxu0 %v504
    %581 = vmatprep.subr.bf16.mxu0 %v501
    %582 = vmatpush1.bf16.msra.mxu0 %v500
    %583 = vmatprep.subr.bf16.mxu0 %v497
    %584 = vmatpush1.bf16.msra.mxu0 %v496
    %585 = vmatprep.subr.bf16.mxu0 %v493
    %586 = vmatpush1.bf16.msra.mxu0 %v492
    %587 = vmatprep.subr.bf16.mxu0 %v489
    %588 = vmatpush1.bf16.msra.mxu0 %v488
    %589 = vmatprep.subr.bf16.mxu0 %v485
    %590 = vmatpush1.bf16.msra.mxu0 %v484
    %591 = vmatprep.subr.bf16.mxu0 %v481
    %592 = vmatpush1.bf16.msra.mxu0 %v480
    %593 = vmatprep.subr.bf16.mxu0 %v477
    %594 = vmatpush1.bf16.msra.mxu0 %v476
    %595 = vmatprep.subr.bf16.mxu0 0
    %596 = vmatpush2.bf16.msra.mxu0 0
    %597 = vmatprep.subr.bf16.mxu0 0
    %598 = vmatpush2.bf16.msra.mxu0 0
    %599 = vmatprep.subr.bf16.mxu0 0
    %600 = vmatpush2.bf16.msra.mxu0 0
    %601 = vmatprep.subr.bf16.mxu0 0
    %602 = vmatpush2.bf16.msra.mxu0 0
    %603 = vmatprep.subr.bf16.mxu0 0
    %604 = vmatpush2.bf16.msra.mxu0 0
    %605 = vmatprep.subr.bf16.mxu0 0
    %606 = vmatpush2.bf16.msra.mxu0 0
    %607 = vmatprep.subr.bf16.mxu0 0
    %608 = vmatpush2.bf16.msra.mxu0 0
    %609 = vmatprep.subr.bf16.mxu0 0
    %610 = vmatpush2.bf16.msra.mxu0 0
    %611 = vmatprep.mubr.bf16.mxu0 0
    %612 = vmatmul.mubr.bf16.gmra.mxu0 0
    %v613 = vpop.f32.mrf.mxu0
    %v614 = vadd.f32 0.0, %v613
    %v615 = vpop.f32.mrf.mxu0
    %v616 = vadd.f32 0.0, %v615
    %v617 = vpop.f32.mrf.mxu0
    %v618 = vpop.f32.mrf.mxu0
    %619 = vdwg.mxu0
    %v620 = vadd.f32 %v235, %v573
    %v621 = vadd.f32 %v237, %v575
    %v622 = vadd.f32 %v308, %v614
    %v623 = vadd.f32 %v310, %v616
    %v624 = vxor.u32 %v620, 2147483648
    %v625 = vmul.f32 %v624, 1.442695
    %v626 = vpow.pop %v625
    %v627 = vadd.f32 %v626, 1.0
    %v628 = vrcp.pop %v627
    %v629 = vmul.f32 1.0, %v628
    %v630 = vxor.u32 %v621, 2147483648
    %v631 = vmul.f32 %v630, 1.442695
    %v632 = vpow.pop %v631
    %v633 = vadd.f32 %v632, 1.0
    %v634 = vrcp.pop %v633
    %v635 = vmul.f32 1.0, %v634
    %v636 = vtanh.pop %v622
    %v637 = vxor.u32 %v623, 2147483648
    %v638 = vmul.f32 %v637, 1.442695
    %v639 = vpow.pop %v638
    %v640 = vadd.f32 %v639, 1.0
    %v641 = vrcp.pop %v640
    %v642 = vmul.f32 1.0, %v641
    %v643 = vmul.f32 %v635, 0.0
    %v644 = vmul.f32 %v629, %v636
    %v645 = vadd.f32 %v643, %v644
    %v646 = vtanh.pop %v645
    %v647 = vmul.f32 %v642, %v646
    %v648 = vpack.c.bf16 %v647, %v647
    %649 = vmatprep.subr.bf16.mxu0 %v503
    %650 = vmatpush1.bf16.msra.mxu0 %v502
    %651 = vmatprep.subr.bf16.mxu0 %v499
    %652 = vmatpush1.bf16.msra.mxu0 %v498
    %653 = vmatprep.subr.bf16.mxu0 %v495
    %654 = vmatpush1.bf16.msra.mxu0 %v494
    %655 = vmatprep.subr.bf16.mxu0 %v491
    %656 = vmatpush1.bf16.msra.mxu0 %v490
    %657 = vmatprep.subr.bf16.mxu0 %v487
    %658 = vmatpush1.bf16.msra.mxu0 %v486
    %659 = vmatprep.subr.bf16.mxu0 %v483
    %660 = vmatpush1.bf16.msra.mxu0 %v482
    %661 = vmatprep.subr.bf16.mxu0 %v479
    %662 = vmatpush1.bf16.msra.mxu0 %v478
    %663 = vmatprep.subr.bf16.mxu0 %v475
    %664 = vmatpush1.bf16.msra.mxu0 %v474
    %665 = vmatprep.subr.bf16.mxu0 0
    %666 = vmatpush2.bf16.msra.mxu0 0
    %667 = vmatprep.subr.bf16.mxu0 0
    %668 = vmatpush2.bf16.msra.mxu0 0
    %669 = vmatprep.subr.bf16.mxu0 0
    %670 = vmatpush2.bf16.msra.mxu0 0
    %671 = vmatprep.subr.bf16.mxu0 0
    %672 = vmatpush2.bf16.msra.mxu0 0
    %673 = vmatprep.subr.bf16.mxu0 0
    %674 = vmatpush2.bf16.msra.mxu0 0
    %675 = vmatprep.subr.bf16.mxu0 0
    %676 = vmatpush2.bf16.msra.mxu0 0
    %677 = vmatprep.subr.bf16.mxu0 0
    %678 = vmatpush2.bf16.msra.mxu0 0
    %679 = vmatprep.subr.bf16.mxu0 0
    %680 = vmatpush2.bf16.msra.mxu0 0
    %681 = vmatprep.mubr.bf16.mxu0 0
    %682 = vmatmul.mubr.bf16.gmra.mxu0 %v648
    %v683 = vpop.f32.mrf.mxu0
    %v684 = vadd.f32 0.0, %v683
    %v685 = vpop.f32.mrf.mxu0
    %v686 = vadd.f32 0.0, %v685
    %v687 = vpop.f32.mrf.mxu0
    %v688 = vpop.f32.mrf.mxu0
    %689 = vdwg.mxu0
    %690 = vmatprep.subr.bf16.mxu0 %v505
    %691 = vmatpush1.bf16.msra.mxu0 %v504
    %692 = vmatprep.subr.bf16.mxu0 %v501
    %693 = vmatpush1.bf16.msra.mxu0 %v500
    %694 = vmatprep.subr.bf16.mxu0 %v497
    %695 = vmatpush1.bf16.msra.mxu0 %v496
    %696 = vmatprep.subr.bf16.mxu0 %v493
    %697 = vmatpush1.bf16.msra.mxu0 %v492
    %698 = vmatprep.subr.bf16.mxu0 %v489
    %699 = vmatpush1.bf16.msra.mxu0 %v488
    %700 = vmatprep.subr.bf16.mxu0 %v485
    %701 = vmatpush1.bf16.msra.mxu0 %v484
    %702 = vmatprep.subr.bf16.mxu0 %v481
    %703 = vmatpush1.bf16.msra.mxu0 %v480
    %704 = vmatprep.subr.bf16.mxu0 %v477
    %705 = vmatpush1.bf16.msra.mxu0 %v476
    %706 = vmatprep.subr.bf16.mxu0 0
    %707 = vmatpush2.bf16.msra.mxu0 0
    %708 = vmatprep.subr.bf16.mxu0 0
    %709 = vmatpush2.bf16.msra.mxu0 0
    %710 = vmatprep.subr.bf16.mxu0 0
    %711 = vmatpush2.bf16.msra.mxu0 0
    %712 = vmatprep.subr.bf16.mxu0 0
    %713 = vmatpush2.bf16.msra.mxu0 0
    %714 = vmatprep.subr.bf16.mxu0 0
    %715 = vmatpush2.bf16.msra.mxu0 0
    %716 = vmatprep.subr.bf16.mxu0 0
    %717 = vmatpush2.bf16.msra.mxu0 0
    %718 = vmatprep.subr.bf16.mxu0 0
    %719 = vmatpush2.bf16.msra.mxu0 0
    %720 = vmatprep.subr.bf16.mxu0 0
    %721 = vmatpush2.bf16.msra.mxu0 0
    %722 = vmatprep.mubr.bf16.mxu0 0
    %723 = vmatmul.mubr.bf16.gmra.mxu0 %v648
    %v724 = vpop.f32.mrf.mxu0
    %v725 = vadd.f32 0.0, %v724
    %v726 = vpop.f32.mrf.mxu0
    %v727 = vadd.f32 0.0, %v726
    %v728 = vpop.f32.mrf.mxu0
    %v729 = vpop.f32.mrf.mxu0
    %730 = vdwg.mxu0
    %v731 = vadd.f32 %v239, %v684
    %v732 = vadd.f32 %v241, %v686
    %v733 = vadd.f32 %v312, %v725
    %v734 = vadd.f32 %v314, %v727
    %v735 = vxor.u32 %v731, 2147483648
    %v736 = vmul.f32 %v735, 1.442695
    %v737 = vpow.pop %v736
    %v738 = vadd.f32 %v737, 1.0
    %v739 = vrcp.pop %v738
    %v740 = vmul.f32 1.0, %v739
    %v741 = vxor.u32 %v732, 2147483648
    %v742 = vmul.f32 %v741, 1.442695
    %v743 = vpow.pop %v742
    %v744 = vadd.f32 %v743, 1.0
    %v745 = vrcp.pop %v744
    %v746 = vmul.f32 1.0, %v745
    %v747 = vtanh.pop %v733
    %v748 = vxor.u32 %v734, 2147483648
    %v749 = vmul.f32 %v748, 1.442695
    %v750 = vpow.pop %v749
    %v751 = vadd.f32 %v750, 1.0
    %v752 = vrcp.pop %v751
    %v753 = vmul.f32 1.0, %v752
    %v754 = vmul.f32 %v746, %v645
    %v755 = vmul.f32 %v740, %v747
    %v756 = vadd.f32 %v754, %v755
    %v757 = vtanh.pop %v756
    %v758 = vmul.f32 %v753, %v757
    %v759 = vpack.c.bf16 %v758, %v758
    %760 = vmatprep.subr.bf16.mxu0 %v503
    %761 = vmatpush1.bf16.msra.mxu0 %v502
    %762 = vmatprep.subr.bf16.mxu0 %v499
    %763 = vmatpush1.bf16.msra.mxu0 %v498
    %764 = vmatprep.subr.bf16.mxu0 %v495
    %765 = vmatpush1.bf16.msra.mxu0 %v494
    %766 = vmatprep.subr.bf16.mxu0 %v491
    %767 = vmatpush1.bf16.msra.mxu0 %v490
    %768 = vmatprep.subr.bf16.mxu0 %v487
    %769 = vmatpush1.bf16.msra.mxu0 %v486
    %770 = vmatprep.subr.bf16.mxu0 %v483
    %771 = vmatpush1.bf16.msra.mxu0 %v482
    %772 = vmatprep.subr.bf16.mxu0 %v479
    %773 = vmatpush1.bf16.msra.mxu0 %v478
    %774 = vmatprep.subr.bf16.mxu0 %v475
    %775 = vmatpush1.bf16.msra.mxu0 %v474
    %776 = vmatprep.subr.bf16.mxu0 0
    %777 = vmatpush2.bf16.msra.mxu0 0
    %778 = vmatprep.subr.bf16.mxu0 0
    %779 = vmatpush2.bf16.msra.mxu0 0
    %780 = vmatprep.subr.bf16.mxu0 0
    %781 = vmatpush2.bf16.msra.mxu0 0
    %782 = vmatprep.subr.bf16.mxu0 0
    %783 = vmatpush2.bf16.msra.mxu0 0
    %784 = vmatprep.subr.bf16.mxu0 0
    %785 = vmatpush2.bf16.msra.mxu0 0
    %786 = vmatprep.subr.bf16.mxu0 0
    %787 = vmatpush2.bf16.msra.mxu0 0
    %788 = vmatprep.subr.bf16.mxu0 0
    %789 = vmatpush2.bf16.msra.mxu0 0
    %790 = vmatprep.subr.bf16.mxu0 0
    %791 = vmatpush2.bf16.msra.mxu0 0
    %792 = vmatprep.mubr.bf16.mxu0 0
    %793 = vmatmul.mubr.bf16.gmra.mxu0 %v759
    %v794 = vpop.f32.mrf.mxu0
    %v795 = vadd.f32 0.0, %v794
    %v796 = vpop.f32.mrf.mxu0
    %v797 = vadd.f32 0.0, %v796
    %v798 = vpop.f32.mrf.mxu0
    %v799 = vpop.f32.mrf.mxu0
    %800 = vdwg.mxu0
    %801 = vmatprep.subr.bf16.mxu0 %v505
    %802 = vmatpush1.bf16.msra.mxu0 %v504
    %803 = vmatprep.subr.bf16.mxu0 %v501
    %804 = vmatpush1.bf16.msra.mxu0 %v500
    %805 = vmatprep.subr.bf16.mxu0 %v497
    %806 = vmatpush1.bf16.msra.mxu0 %v496
    %807 = vmatprep.subr.bf16.mxu0 %v493
    %808 = vmatpush1.bf16.msra.mxu0 %v492
    %809 = vmatprep.subr.bf16.mxu0 %v489
    %810 = vmatpush1.bf16.msra.mxu0 %v488
    %811 = vmatprep.subr.bf16.mxu0 %v485
    %812 = vmatpush1.bf16.msra.mxu0 %v484
    %813 = vmatprep.subr.bf16.mxu0 %v481
    %814 = vmatpush1.bf16.msra.mxu0 %v480
    %815 = vmatprep.subr.bf16.mxu0 %v477
    %816 = vmatpush1.bf16.msra.mxu0 %v476
    %817 = vmatprep.subr.bf16.mxu0 0
    %818 = vmatpush2.bf16.msra.mxu0 0
    %819 = vmatprep.subr.bf16.mxu0 0
    %820 = vmatpush2.bf16.msra.mxu0 0
    %821 = vmatprep.subr.bf16.mxu0 0
    %822 = vmatpush2.bf16.msra.mxu0 0
    %823 = vmatprep.subr.bf16.mxu0 0
    %824 = vmatpush2.bf16.msra.mxu0 0
    %825 = vmatprep.subr.bf16.mxu0 0
    %826 = vmatpush2.bf16.msra.mxu0 0
    %827 = vmatprep.subr.bf16.mxu0 0
    %828 = vmatpush2.bf16.msra.mxu0 0
    %829 = vmatprep.subr.bf16.mxu0 0
    %830 = vmatpush2.bf16.msra.mxu0 0
    %831 = vmatprep.subr.bf16.mxu0 0
    %832 = vmatpush2.bf16.msra.mxu0 0
    %833 = vmatprep.mubr.bf16.mxu0 0
    %834 = vmatmul.mubr.bf16.gmra.mxu0 %v759
    %v835 = vpop.f32.mrf.mxu0
    %v836 = vadd.f32 0.0, %v835
    %v837 = vpop.f32.mrf.mxu0
    %v838 = vadd.f32 0.0, %v837
    %v839 = vpop.f32.mrf.mxu0
    %v840 = vpop.f32.mrf.mxu0
    %841 = vdwg.mxu0
    %v842 = vadd.f32 %v245, %v795
    %v843 = vadd.f32 %v247, %v797
    %v844 = vadd.f32 %v318, %v836
    %v845 = vadd.f32 %v320, %v838
    %v846 = vxor.u32 %v842, 2147483648
    %v847 = vmul.f32 %v846, 1.442695
    %v848 = vpow.pop %v847
    %v849 = vadd.f32 %v848, 1.0
    %v850 = vrcp.pop %v849
    %v851 = vmul.f32 1.0, %v850
    %v852 = vxor.u32 %v843, 2147483648
    %v853 = vmul.f32 %v852, 1.442695
    %v854 = vpow.pop %v853
    %v855 = vadd.f32 %v854, 1.0
    %v856 = vrcp.pop %v855
    %v857 = vmul.f32 1.0, %v856
    %v858 = vtanh.pop %v844
    %v859 = vxor.u32 %v845, 2147483648
    %v860 = vmul.f32 %v859, 1.442695
    %v861 = vpow.pop %v860
    %v862 = vadd.f32 %v861, 1.0
    %v863 = vrcp.pop %v862
    %v864 = vmul.f32 1.0, %v863
    %v865 = vmul.f32 %v857, %v756
    %v866 = vmul.f32 %v851, %v858
    %v867 = vadd.f32 %v865, %v866
    %v868 = vtanh.pop %v867
    %v869 = vmul.f32 %v864, %v868
    %v870 = vpack.c.bf16 %v869, %v869
    %871 = vmatprep.subr.bf16.mxu0 %v503
    %872 = vmatpush1.bf16.msra.mxu0 %v502
    %873 = vmatprep.subr.bf16.mxu0 %v499
    %874 = vmatpush1.bf16.msra.mxu0 %v498
    %875 = vmatprep.subr.bf16.mxu0 %v495
    %876 = vmatpush1.bf16.msra.mxu0 %v494
    %877 = vmatprep.subr.bf16.mxu0 %v491
    %878 = vmatpush1.bf16.msra.mxu0 %v490
    %879 = vmatprep.subr.bf16.mxu0 %v487
    %880 = vmatpush1.bf16.msra.mxu0 %v486
    %881 = vmatprep.subr.bf16.mxu0 %v483
    %882 = vmatpush1.bf16.msra.mxu0 %v482
    %883 = vmatprep.subr.bf16.mxu0 %v479
    %884 = vmatpush1.bf16.msra.mxu0 %v478
    %885 = vmatprep.subr.bf16.mxu0 %v475
    %886 = vmatpush1.bf16.msra.mxu0 %v474
    %887 = vmatprep.subr.bf16.mxu0 0
    %888 = vmatpush2.bf16.msra.mxu0 0
    %889 = vmatprep.subr.bf16.mxu0 0
    %890 = vmatpush2.bf16.msra.mxu0 0
    %891 = vmatprep.subr.bf16.mxu0 0
    %892 = vmatpush2.bf16.msra.mxu0 0
    %893 = vmatprep.subr.bf16.mxu0 0
    %894 = vmatpush2.bf16.msra.mxu0 0
    %895 = vmatprep.subr.bf16.mxu0 0
    %896 = vmatpush2.bf16.msra.mxu0 0
    %897 = vmatprep.subr.bf16.mxu0 0
    %898 = vmatpush2.bf16.msra.mxu0 0
    %899 = vmatprep.subr.bf16.mxu0 0
    %900 = vmatpush2.bf16.msra.mxu0 0
    %901 = vmatprep.subr.bf16.mxu0 0
    %902 = vmatpush2.bf16.msra.mxu0 0
    %903 = vmatprep.mubr.bf16.mxu0 0
    %904 = vmatmul.mubr.bf16.gmra.mxu0 %v870
    %v905 = vpop.f32.mrf.mxu0
    %v906 = vadd.f32 0.0, %v905
    %v907 = vpop.f32.mrf.mxu0
    %v908 = vadd.f32 0.0, %v907
    %v909 = vpop.f32.mrf.mxu0
    %v910 = vpop.f32.mrf.mxu0
    %911 = vdwg.mxu0
    %912 = vmatprep.subr.bf16.mxu0 %v505
    %913 = vmatpush1.bf16.msra.mxu0 %v504
    %914 = vmatprep.subr.bf16.mxu0 %v501
    %915 = vmatpush1.bf16.msra.mxu0 %v500
    %916 = vmatprep.subr.bf16.mxu0 %v497
    %917 = vmatpush1.bf16.msra.mxu0 %v496
    %918 = vmatprep.subr.bf16.mxu0 %v493
    %919 = vmatpush1.bf16.msra.mxu0 %v492
    %920 = vmatprep.subr.bf16.mxu0 %v489
    %921 = vmatpush1.bf16.msra.mxu0 %v488
    %922 = vmatprep.subr.bf16.mxu0 %v485
    %923 = vmatpush1.bf16.msra.mxu0 %v484
    %924 = vmatprep.subr.bf16.mxu0 %v481
    %925 = vmatpush1.bf16.msra.mxu0 %v480
    %926 = vmatprep.subr.bf16.mxu0 %v477
    %927 = vmatpush1.bf16.msra.mxu0 %v476
    %928 = vmatprep.subr.bf16.mxu0 0
    %929 = vmatpush2.bf16.msra.mxu0 0
    %930 = vmatprep.subr.bf16.mxu0 0
    %931 = vmatpush2.bf16.msra.mxu0 0
    %932 = vmatprep.subr.bf16.mxu0 0
    %933 = vmatpush2.bf16.msra.mxu0 0
    %934 = vmatprep.subr.bf16.mxu0 0
    %935 = vmatpush2.bf16.msra.mxu0 0
    %936 = vmatprep.subr.bf16.mxu0 0
    %937 = vmatpush2.bf16.msra.mxu0 0
    %938 = vmatprep.subr.bf16.mxu0 0
    %939 = vmatpush2.bf16.msra.mxu0 0
    %940 = vmatprep.subr.bf16.mxu0 0
    %941 = vmatpush2.bf16.msra.mxu0 0
    %942 = vmatprep.subr.bf16.mxu0 0
    %943 = vmatpush2.bf16.msra.mxu0 0
    %944 = vmatprep.mubr.bf16.mxu0 0
    %945 = vmatmul.mubr.bf16.gmra.mxu0 %v870
    %v946 = vpop.f32.mrf.mxu0
    %v947 = vadd.f32 0.0, %v946
    %v948 = vpop.f32.mrf.mxu0
    %v949 = vadd.f32 0.0, %v948
    %v950 = vpop.f32.mrf.mxu0
    %v951 = vpop.f32.mrf.mxu0
    %952 = vdwg.mxu0
    %v953 = vadd.f32 %v249, %v906
    %v954 = vadd.f32 %v251, %v908
    %v955 = vadd.f32 %v322, %v947
    %v956 = vadd.f32 %v324, %v949
    %v957 = vxor.u32 %v953, 2147483648
    %v958 = vmul.f32 %v957, 1.442695
    %v959 = vpow.pop %v958
    %v960 = vadd.f32 %v959, 1.0
    %v961 = vrcp.pop %v960
    %v962 = vmul.f32 1.0, %v961
    %v963 = vxor.u32 %v954, 2147483648
    %v964 = vmul.f32 %v963, 1.442695
    %v965 = vpow.pop %v964
    %v966 = vadd.f32 %v965, 1.0
    %v967 = vrcp.pop %v966
    %v968 = vmul.f32 1.0, %v967
    %v969 = vtanh.pop %v955
    %v970 = vxor.u32 %v956, 2147483648
    %v971 = vmul.f32 %v970, 1.442695
    %v972 = vpow.pop %v971
    %v973 = vadd.f32 %v972, 1.0
    %v974 = vrcp.pop %v973
    %v975 = vmul.f32 1.0, %v974
    %v976 = vmul.f32 %v968, %v867
    %v977 = vmul.f32 %v962, %v969
    %v978 = vadd.f32 %v976, %v977
    %v979 = vtanh.pop %v978
    %v980 = vmul.f32 %v975, %v979
    %v981 = vpack.c.bf16 %v980, %v980
    %982 = vmatprep.subr.bf16.mxu0 %v503
    %983 = vmatpush1.bf16.msra.mxu0 %v502
    %984 = vmatprep.subr.bf16.mxu0 %v499
    %985 = vmatpush1.bf16.msra.mxu0 %v498
    %986 = vmatprep.subr.bf16.mxu0 %v495
    %987 = vmatpush1.bf16.msra.mxu0 %v494
    %988 = vmatprep.subr.bf16.mxu0 %v491
    %989 = vmatpush1.bf16.msra.mxu0 %v490
    %990 = vmatprep.subr.bf16.mxu0 %v487
    %991 = vmatpush1.bf16.msra.mxu0 %v486
    %992 = vmatprep.subr.bf16.mxu0 %v483
    %993 = vmatpush1.bf16.msra.mxu0 %v482
    %994 = vmatprep.subr.bf16.mxu0 %v479
    %995 = vmatpush1.bf16.msra.mxu0 %v478
    %996 = vmatprep.subr.bf16.mxu0 %v475
    %997 = vmatpush1.bf16.msra.mxu0 %v474
    %998 = vmatprep.subr.bf16.mxu0 0
    %999 = vmatpush2.bf16.msra.mxu0 0
    %1000 = vmatprep.subr.bf16.mxu0 0
    %1001 = vmatpush2.bf16.msra.mxu0 0
    %1002 = vmatprep.subr.bf16.mxu0 0
    %1003 = vmatpush2.bf16.msra.mxu0 0
    %1004 = vmatprep.subr.bf16.mxu0 0
    %1005 = vmatpush2.bf16.msra.mxu0 0
    %1006 = vmatprep.subr.bf16.mxu0 0
    %1007 = vmatpush2.bf16.msra.mxu0 0
    %1008 = vmatprep.subr.bf16.mxu0 0
    %1009 = vmatpush2.bf16.msra.mxu0 0
    %1010 = vmatprep.subr.bf16.mxu0 0
    %1011 = vmatpush2.bf16.msra.mxu0 0
    %1012 = vmatprep.subr.bf16.mxu0 0
    %1013 = vmatpush2.bf16.msra.mxu0 0
    %1014 = vmatprep.mubr.bf16.mxu0 0
    %1015 = vmatmul.mubr.bf16.gmra.mxu0 %v981
    %v1016 = vpop.f32.mrf.mxu0
    %v1017 = vadd.f32 0.0, %v1016
    %v1018 = vpop.f32.mrf.mxu0
    %v1019 = vadd.f32 0.0, %v1018
    %v1020 = vpop.f32.mrf.mxu0
    %v1021 = vpop.f32.mrf.mxu0
    %1022 = vdwg.mxu0
    %1023 = vmatprep.subr.bf16.mxu0 %v505
    %1024 = vmatpush1.bf16.msra.mxu0 %v504
    %1025 = vmatprep.subr.bf16.mxu0 %v501
    %1026 = vmatpush1.bf16.msra.mxu0 %v500
    %1027 = vmatprep.subr.bf16.mxu0 %v497
    %1028 = vmatpush1.bf16.msra.mxu0 %v496
    %1029 = vmatprep.subr.bf16.mxu0 %v493
    %1030 = vmatpush1.bf16.msra.mxu0 %v492
    %1031 = vmatprep.subr.bf16.mxu0 %v489
    %1032 = vmatpush1.bf16.msra.mxu0 %v488
    %1033 = vmatprep.subr.bf16.mxu0 %v485
    %1034 = vmatpush1.bf16.msra.mxu0 %v484
    %1035 = vmatprep.subr.bf16.mxu0 %v481
    %1036 = vmatpush1.bf16.msra.mxu0 %v480
    %1037 = vmatprep.subr.bf16.mxu0 %v477
    %1038 = vmatpush1.bf16.msra.mxu0 %v476
    %1039 = vmatprep.subr.bf16.mxu0 0
    %1040 = vmatpush2.bf16.msra.mxu0 0
    %1041 = vmatprep.subr.bf16.mxu0 0
    %1042 = vmatpush2.bf16.msra.mxu0 0
    %1043 = vmatprep.subr.bf16.mxu0 0
    %1044 = vmatpush2.bf16.msra.mxu0 0
    %1045 = vmatprep.subr.bf16.mxu0 0
    %1046 = vmatpush2.bf16.msra.mxu0 0
    %1047 = vmatprep.subr.bf16.mxu0 0
    %1048 = vmatpush2.bf16.msra.mxu0 0
    %1049 = vmatprep.subr.bf16.mxu0 0
    %1050 = vmatpush2.bf16.msra.mxu0 0
    %1051 = vmatprep.subr.bf16.mxu0 0
    %1052 = vmatpush2.bf16.msra.mxu0 0
    %1053 = vmatprep.subr.bf16.mxu0 0
    %1054 = vmatpush2.bf16.msra.mxu0 0
    %1055 = vmatprep.mubr.bf16.mxu0 0
    %1056 = vmatmul.mubr.bf16.gmra.mxu0 %v981
    %v1057 = vpop.f32.mrf.mxu0
    %v1058 = vadd.f32 0.0, %v1057
    %v1059 = vpop.f32.mrf.mxu0
    %v1060 = vadd.f32 0.0, %v1059
    %v1061 = vpop.f32.mrf.mxu0
    %v1062 = vpop.f32.mrf.mxu0
    %1063 = vdwg.mxu0
    %v1064 = vadd.f32 %v255, %v1017
    %v1065 = vadd.f32 %v257, %v1019
    %v1066 = vadd.f32 %v328, %v1058
    %v1067 = vadd.f32 %v330, %v1060
    %v1068 = vxor.u32 %v1064, 2147483648
    %v1069 = vmul.f32 %v1068, 1.442695
    %v1070 = vpow.pop %v1069
    %v1071 = vadd.f32 %v1070, 1.0
    %v1072 = vrcp.pop %v1071
    %v1073 = vmul.f32 1.0, %v1072
    %v1074 = vxor.u32 %v1065, 2147483648
    %v1075 = vmul.f32 %v1074, 1.442695
    %v1076 = vpow.pop %v1075
    %v1077 = vadd.f32 %v1076, 1.0
    %v1078 = vrcp.pop %v1077
    %v1079 = vmul.f32 1.0, %v1078
    %v1080 = vtanh.pop %v1066
    %v1081 = vxor.u32 %v1067, 2147483648
    %v1082 = vmul.f32 %v1081, 1.442695
    %v1083 = vpow.pop %v1082
    %v1084 = vadd.f32 %v1083, 1.0
    %v1085 = vrcp.pop %v1084
    %v1086 = vmul.f32 1.0, %v1085
    %v1087 = vmul.f32 %v1079, %v978
    %v1088 = vmul.f32 %v1073, %v1080
    %v1089 = vadd.f32 %v1087, %v1088
    %v1090 = vtanh.pop %v1089
    %v1091 = vmul.f32 %v1086, %v1090
    %v1092 = vpack.c.bf16 %v1091, %v1091
    %1093 = vmatprep.subr.bf16.mxu0 %v503
    %1094 = vmatpush1.bf16.msra.mxu0 %v502
    %1095 = vmatprep.subr.bf16.mxu0 %v499
    %1096 = vmatpush1.bf16.msra.mxu0 %v498
    %1097 = vmatprep.subr.bf16.mxu0 %v495
    %1098 = vmatpush1.bf16.msra.mxu0 %v494
    %1099 = vmatprep.subr.bf16.mxu0 %v491
    %1100 = vmatpush1.bf16.msra.mxu0 %v490
    %1101 = vmatprep.subr.bf16.mxu0 %v487
    %1102 = vmatpush1.bf16.msra.mxu0 %v486
    %1103 = vmatprep.subr.bf16.mxu0 %v483
    %1104 = vmatpush1.bf16.msra.mxu0 %v482
    %1105 = vmatprep.subr.bf16.mxu0 %v479
    %1106 = vmatpush1.bf16.msra.mxu0 %v478
    %1107 = vmatprep.subr.bf16.mxu0 %v475
    %1108 = vmatpush1.bf16.msra.mxu0 %v474
    %1109 = vmatprep.subr.bf16.mxu0 0
    %1110 = vmatpush2.bf16.msra.mxu0 0
    %1111 = vmatprep.subr.bf16.mxu0 0
    %1112 = vmatpush2.bf16.msra.mxu0 0
    %1113 = vmatprep.subr.bf16.mxu0 0
    %1114 = vmatpush2.bf16.msra.mxu0 0
    %1115 = vmatprep.subr.bf16.mxu0 0
    %1116 = vmatpush2.bf16.msra.mxu0 0
    %1117 = vmatprep.subr.bf16.mxu0 0
    %1118 = vmatpush2.bf16.msra.mxu0 0
    %1119 = vmatprep.subr.bf16.mxu0 0
    %1120 = vmatpush2.bf16.msra.mxu0 0
    %1121 = vmatprep.subr.bf16.mxu0 0
    %1122 = vmatpush2.bf16.msra.mxu0 0
    %1123 = vmatprep.subr.bf16.mxu0 0
    %1124 = vmatpush2.bf16.msra.mxu0 0
    %1125 = vmatprep.mubr.bf16.mxu0 0
    %1126 = vmatmul.mubr.bf16.gmra.mxu0 %v1092
    %v1127 = vpop.f32.mrf.mxu0
    %v1128 = vadd.f32 0.0, %v1127
    %v1129 = vpop.f32.mrf.mxu0
    %v1130 = vadd.f32 0.0, %v1129
    %v1131 = vpop.f32.mrf.mxu0
    %v1132 = vpop.f32.mrf.mxu0
    %1133 = vdwg.mxu0
    %1134 = vmatprep.subr.bf16.mxu0 %v505
    %1135 = vmatpush1.bf16.msra.mxu0 %v504
    %1136 = vmatprep.subr.bf16.mxu0 %v501
    %1137 = vmatpush1.bf16.msra.mxu0 %v500
    %1138 = vmatprep.subr.bf16.mxu0 %v497
    %1139 = vmatpush1.bf16.msra.mxu0 %v496
    %1140 = vmatprep.subr.bf16.mxu0 %v493
    %1141 = vmatpush1.bf16.msra.mxu0 %v492
    %1142 = vmatprep.subr.bf16.mxu0 %v489
    %1143 = vmatpush1.bf16.msra.mxu0 %v488
    %1144 = vmatprep.subr.bf16.mxu0 %v485
    %1145 = vmatpush1.bf16.msra.mxu0 %v484
    %1146 = vmatprep.subr.bf16.mxu0 %v481
    %1147 = vmatpush1.bf16.msra.mxu0 %v480
    %1148 = vmatprep.subr.bf16.mxu0 %v477
    %1149 = vmatpush1.bf16.msra.mxu0 %v476
    %1150 = vmatprep.subr.bf16.mxu0 0
    %1151 = vmatpush2.bf16.msra.mxu0 0
    %1152 = vmatprep.subr.bf16.mxu0 0
    %1153 = vmatpush2.bf16.msra.mxu0 0
    %1154 = vmatprep.subr.bf16.mxu0 0
    %1155 = vmatpush2.bf16.msra.mxu0 0
    %1156 = vmatprep.subr.bf16.mxu0 0
    %1157 = vmatpush2.bf16.msra.mxu0 0
    %1158 = vmatprep.subr.bf16.mxu0 0
    %1159 = vmatpush2.bf16.msra.mxu0 0
    %1160 = vmatprep.subr.bf16.mxu0 0
    %1161 = vmatpush2.bf16.msra.mxu0 0
    %1162 = vmatprep.subr.bf16.mxu0 0
    %1163 = vmatpush2.bf16.msra.mxu0 0
    %1164 = vmatprep.subr.bf16.mxu0 0
    %1165 = vmatpush2.bf16.msra.mxu0 0
    %1166 = vmatprep.mubr.bf16.mxu0 0
    %1167 = vmatmul.mubr.bf16.gmra.mxu0 %v1092
    %v1168 = vpop.f32.mrf.mxu0
    %v1169 = vadd.f32 0.0, %v1168
    %v1170 = vpop.f32.mrf.mxu0
    %v1171 = vadd.f32 0.0, %v1170
    %v1172 = vpop.f32.mrf.mxu0
    %v1173 = vpop.f32.mrf.mxu0
    %1174 = vdwg.mxu0
    %v1175 = vadd.f32 %v259, %v1128
    %v1176 = vadd.f32 %v261, %v1130
    %v1177 = vadd.f32 %v332, %v1169
    %v1178 = vadd.f32 %v334, %v1171
    %v1179 = vxor.u32 %v1175, 2147483648
    %v1180 = vmul.f32 %v1179, 1.442695
    %v1181 = vpow.pop %v1180
    %v1182 = vadd.f32 %v1181, 1.0
    %v1183 = vrcp.pop %v1182
    %v1184 = vmul.f32 1.0, %v1183
    %v1185 = vxor.u32 %v1176, 2147483648
    %v1186 = vmul.f32 %v1185, 1.442695
    %v1187 = vpow.pop %v1186
    %v1188 = vadd.f32 %v1187, 1.0
    %v1189 = vrcp.pop %v1188
    %v1190 = vmul.f32 1.0, %v1189
    %v1191 = vtanh.pop %v1177
    %v1192 = vxor.u32 %v1178, 2147483648
    %v1193 = vmul.f32 %v1192, 1.442695
    %v1194 = vpow.pop %v1193
    %v1195 = vadd.f32 %v1194, 1.0
    %v1196 = vrcp.pop %v1195
    %v1197 = vmul.f32 1.0, %v1196
    %v1198 = vmul.f32 %v1190, %v1089
    %v1199 = vmul.f32 %v1184, %v1191
    %v1200 = vadd.f32 %v1198, %v1199
    %v1201 = vtanh.pop %v1200
    %v1202 = vmul.f32 %v1197, %v1201
    %v1203 = vpack.c.bf16 %v1202, %v1202
    %1204 = vmatprep.subr.bf16.mxu0 %v503
    %1205 = vmatpush1.bf16.msra.mxu0 %v502
    %1206 = vmatprep.subr.bf16.mxu0 %v499
    %1207 = vmatpush1.bf16.msra.mxu0 %v498
    %1208 = vmatprep.subr.bf16.mxu0 %v495
    %1209 = vmatpush1.bf16.msra.mxu0 %v494
    %1210 = vmatprep.subr.bf16.mxu0 %v491
    %1211 = vmatpush1.bf16.msra.mxu0 %v490
    %1212 = vmatprep.subr.bf16.mxu0 %v487
    %1213 = vmatpush1.bf16.msra.mxu0 %v486
    %1214 = vmatprep.subr.bf16.mxu0 %v483
    %1215 = vmatpush1.bf16.msra.mxu0 %v482
    %1216 = vmatprep.subr.bf16.mxu0 %v479
    %1217 = vmatpush1.bf16.msra.mxu0 %v478
    %1218 = vmatprep.subr.bf16.mxu0 %v475
    %1219 = vmatpush1.bf16.msra.mxu0 %v474
    %1220 = vmatprep.subr.bf16.mxu0 0
    %1221 = vmatpush2.bf16.msra.mxu0 0
    %1222 = vmatprep.subr.bf16.mxu0 0
    %1223 = vmatpush2.bf16.msra.mxu0 0
    %1224 = vmatprep.subr.bf16.mxu0 0
    %1225 = vmatpush2.bf16.msra.mxu0 0
    %1226 = vmatprep.subr.bf16.mxu0 0
    %1227 = vmatpush2.bf16.msra.mxu0 0
    %1228 = vmatprep.subr.bf16.mxu0 0
    %1229 = vmatpush2.bf16.msra.mxu0 0
    %1230 = vmatprep.subr.bf16.mxu0 0
    %1231 = vmatpush2.bf16.msra.mxu0 0
    %1232 = vmatprep.subr.bf16.mxu0 0
    %1233 = vmatpush2.bf16.msra.mxu0 0
    %1234 = vmatprep.subr.bf16.mxu0 0
    %1235 = vmatpush2.bf16.msra.mxu0 0
    %1236 = vmatprep.mubr.bf16.mxu0 0
    %1237 = vmatmul.mubr.bf16.gmra.mxu0 %v1203
    %v1238 = vpop.f32.mrf.mxu0
    %v1239 = vadd.f32 0.0, %v1238
    %v1240 = vpop.f32.mrf.mxu0
    %v1241 = vadd.f32 0.0, %v1240
    %v1242 = vpop.f32.mrf.mxu0
    %v1243 = vpop.f32.mrf.mxu0
    %1244 = vdwg.mxu0
    %1245 = vmatprep.subr.bf16.mxu0 %v505
    %1246 = vmatpush1.bf16.msra.mxu0 %v504
    %1247 = vmatprep.subr.bf16.mxu0 %v501
    %1248 = vmatpush1.bf16.msra.mxu0 %v500
    %1249 = vmatprep.subr.bf16.mxu0 %v497
    %1250 = vmatpush1.bf16.msra.mxu0 %v496
    %1251 = vmatprep.subr.bf16.mxu0 %v493
    %1252 = vmatpush1.bf16.msra.mxu0 %v492
    %1253 = vmatprep.subr.bf16.mxu0 %v489
    %1254 = vmatpush1.bf16.msra.mxu0 %v488
    %1255 = vmatprep.subr.bf16.mxu0 %v485
    %1256 = vmatpush1.bf16.msra.mxu0 %v484
    %1257 = vmatprep.subr.bf16.mxu0 %v481
    %1258 = vmatpush1.bf16.msra.mxu0 %v480
    %1259 = vmatprep.subr.bf16.mxu0 %v477
    %1260 = vmatpush1.bf16.msra.mxu0 %v476
    %1261 = vmatprep.subr.bf16.mxu0 0
    %1262 = vmatpush2.bf16.msra.mxu0 0
    %1263 = vmatprep.subr.bf16.mxu0 0
    %1264 = vmatpush2.bf16.msra.mxu0 0
    %1265 = vmatprep.subr.bf16.mxu0 0
    %1266 = vmatpush2.bf16.msra.mxu0 0
    %1267 = vmatprep.subr.bf16.mxu0 0
    %1268 = vmatpush2.bf16.msra.mxu0 0
    %1269 = vmatprep.subr.bf16.mxu0 0
    %1270 = vmatpush2.bf16.msra.mxu0 0
    %1271 = vmatprep.subr.bf16.mxu0 0
    %1272 = vmatpush2.bf16.msra.mxu0 0
    %1273 = vmatprep.subr.bf16.mxu0 0
    %1274 = vmatpush2.bf16.msra.mxu0 0
    %1275 = vmatprep.subr.bf16.mxu0 0
    %1276 = vmatpush2.bf16.msra.mxu0 0
    %1277 = vmatprep.mubr.bf16.mxu0 0
    %1278 = vmatmul.mubr.bf16.gmra.mxu0 %v1203
    %v1279 = vpop.f32.mrf.mxu0
    %v1280 = vadd.f32 0.0, %v1279
    %v1281 = vpop.f32.mrf.mxu0
    %v1282 = vadd.f32 0.0, %v1281
    %v1283 = vpop.f32.mrf.mxu0
    %v1284 = vpop.f32.mrf.mxu0
    %1285 = vdwg.mxu0
    %v1286 = vadd.f32 %v265, %v1239
    %v1287 = vadd.f32 %v267, %v1241
    %v1288 = vadd.f32 %v338, %v1280
    %v1289 = vadd.f32 %v340, %v1282
    %v1290 = vxor.u32 %v1286, 2147483648
    %v1291 = vmul.f32 %v1290, 1.442695
    %v1292 = vpow.pop %v1291
    %v1293 = vadd.f32 %v1292, 1.0
    %v1294 = vrcp.pop %v1293
    %v1295 = vmul.f32 1.0, %v1294
    %v1296 = vxor.u32 %v1287, 2147483648
    %v1297 = vmul.f32 %v1296, 1.442695
    %v1298 = vpow.pop %v1297
    %v1299 = vadd.f32 %v1298, 1.0
    %v1300 = vrcp.pop %v1299
    %v1301 = vmul.f32 1.0, %v1300
    %v1302 = vtanh.pop %v1288
    %v1303 = vxor.u32 %v1289, 2147483648
    %v1304 = vmul.f32 %v1303, 1.442695
    %v1305 = vpow.pop %v1304
    %v1306 = vadd.f32 %v1305, 1.0
    %v1307 = vrcp.pop %v1306
    %v1308 = vmul.f32 1.0, %v1307
    %v1309 = vmul.f32 %v1301, %v1200
    %v1310 = vmul.f32 %v1295, %v1302
    %v1311 = vadd.f32 %v1309, %v1310
    %v1312 = vtanh.pop %v1311
    %v1313 = vmul.f32 %v1308, %v1312
    %v1314 = vpack.c.bf16 %v1313, %v1313
    %1315 = vmatprep.subr.bf16.mxu0 %v503
    %1316 = vmatpush1.bf16.msra.mxu0 %v502
    %1317 = vmatprep.subr.bf16.mxu0 %v499
    %1318 = vmatpush1.bf16.msra.mxu0 %v498
    %1319 = vmatprep.subr.bf16.mxu0 %v495
    %1320 = vmatpush1.bf16.msra.mxu0 %v494
    %1321 = vmatprep.subr.bf16.mxu0 %v491
    %1322 = vmatpush1.bf16.msra.mxu0 %v490
    %1323 = vmatprep.subr.bf16.mxu0 %v487
    %1324 = vmatpush1.bf16.msra.mxu0 %v486
    %1325 = vmatprep.subr.bf16.mxu0 %v483
    %1326 = vmatpush1.bf16.msra.mxu0 %v482
    %1327 = vmatprep.subr.bf16.mxu0 %v479
    %1328 = vmatpush1.bf16.msra.mxu0 %v478
    %1329 = vmatprep.subr.bf16.mxu0 %v475
    %1330 = vmatpush1.bf16.msra.mxu0 %v474
    %1331 = vmatprep.subr.bf16.mxu0 0
    %1332 = vmatpush2.bf16.msra.mxu0 0
    %1333 = vmatprep.subr.bf16.mxu0 0
    %1334 = vmatpush2.bf16.msra.mxu0 0
    %1335 = vmatprep.subr.bf16.mxu0 0
    %1336 = vmatpush2.bf16.msra.mxu0 0
    %1337 = vmatprep.subr.bf16.mxu0 0
    %1338 = vmatpush2.bf16.msra.mxu0 0
    %1339 = vmatprep.subr.bf16.mxu0 0
    %1340 = vmatpush2.bf16.msra.mxu0 0
    %1341 = vmatprep.subr.bf16.mxu0 0
    %1342 = vmatpush2.bf16.msra.mxu0 0
    %1343 = vmatprep.subr.bf16.mxu0 0
    %1344 = vmatpush2.bf16.msra.mxu0 0
    %1345 = vmatprep.subr.bf16.mxu0 0
    %1346 = vmatpush2.bf16.msra.mxu0 0
    %1347 = vmatprep.mubr.bf16.mxu0 0
    %1348 = vmatmul.mubr.bf16.gmra.mxu0 %v1314
    %v1349 = vpop.f32.mrf.mxu0
    %v1350 = vadd.f32 0.0, %v1349
    %v1351 = vpop.f32.mrf.mxu0
    %v1352 = vadd.f32 0.0, %v1351
    %v1353 = vpop.f32.mrf.mxu0
    %v1354 = vpop.f32.mrf.mxu0
    %1355 = vdwg.mxu0
    %1356 = vmatprep.subr.bf16.mxu0 %v505
    %1357 = vmatpush1.bf16.msra.mxu0 %v504
    %1358 = vmatprep.subr.bf16.mxu0 %v501
    %1359 = vmatpush1.bf16.msra.mxu0 %v500
    %1360 = vmatprep.subr.bf16.mxu0 %v497
    %1361 = vmatpush1.bf16.msra.mxu0 %v496
    %1362 = vmatprep.subr.bf16.mxu0 %v493
    %1363 = vmatpush1.bf16.msra.mxu0 %v492
    %1364 = vmatprep.subr.bf16.mxu0 %v489
    %1365 = vmatpush1.bf16.msra.mxu0 %v488
    %1366 = vmatprep.subr.bf16.mxu0 %v485
    %1367 = vmatpush1.bf16.msra.mxu0 %v484
    %1368 = vmatprep.subr.bf16.mxu0 %v481
    %1369 = vmatpush1.bf16.msra.mxu0 %v480
    %1370 = vmatprep.subr.bf16.mxu0 %v477
    %1371 = vmatpush1.bf16.msra.mxu0 %v476
    %1372 = vmatprep.subr.bf16.mxu0 0
    %1373 = vmatpush2.bf16.msra.mxu0 0
    %1374 = vmatprep.subr.bf16.mxu0 0
    %1375 = vmatpush2.bf16.msra.mxu0 0
    %1376 = vmatprep.subr.bf16.mxu0 0
    %1377 = vmatpush2.bf16.msra.mxu0 0
    %1378 = vmatprep.subr.bf16.mxu0 0
    %1379 = vmatpush2.bf16.msra.mxu0 0
    %1380 = vmatprep.subr.bf16.mxu0 0
    %1381 = vmatpush2.bf16.msra.mxu0 0
    %1382 = vmatprep.subr.bf16.mxu0 0
    %1383 = vmatpush2.bf16.msra.mxu0 0
    %1384 = vmatprep.subr.bf16.mxu0 0
    %1385 = vmatpush2.bf16.msra.mxu0 0
    %1386 = vmatprep.subr.bf16.mxu0 0
    %1387 = vmatpush2.bf16.msra.mxu0 0
    %1388 = vmatprep.mubr.bf16.mxu0 0
    %1389 = vmatmul.mubr.bf16.gmra.mxu0 %v1314
    %v1390 = vpop.f32.mrf.mxu0
    %v1391 = vadd.f32 0.0, %v1390
    %v1392 = vpop.f32.mrf.mxu0
    %v1393 = vadd.f32 0.0, %v1392
    %v1394 = vpop.f32.mrf.mxu0
    %v1395 = vpop.f32.mrf.mxu0
    %1396 = vdwg.mxu0
    %v1397 = vadd.f32 %v269, %v1350
    %v1398 = vadd.f32 %v271, %v1352
    %v1399 = vadd.f32 %v342, %v1391
    %v1400 = vadd.f32 %v344, %v1393
    %v1401 = vxor.u32 %v1397, 2147483648
    %v1402 = vmul.f32 %v1401, 1.442695
    %v1403 = vpow.pop %v1402
    %v1404 = vadd.f32 %v1403, 1.0
    %v1405 = vrcp.pop %v1404
    %v1406 = vmul.f32 1.0, %v1405
    %v1407 = vxor.u32 %v1398, 2147483648
    %v1408 = vmul.f32 %v1407, 1.442695
    %v1409 = vpow.pop %v1408
    %v1410 = vadd.f32 %v1409, 1.0
    %v1411 = vrcp.pop %v1410
    %v1412 = vmul.f32 1.0, %v1411
    %v1413 = vtanh.pop %v1399
    %v1414 = vxor.u32 %v1400, 2147483648
    %v1415 = vmul.f32 %v1414, 1.442695
    %v1416 = vpow.pop %v1415
    %v1417 = vadd.f32 %v1416, 1.0
    %v1418 = vrcp.pop %v1417
    %v1419 = vmul.f32 1.0, %v1418
    %v1420 = vmul.f32 %v1412, %v1311
    %v1421 = vmul.f32 %v1406, %v1413
    %v1422 = vadd.f32 %v1420, %v1421
    %v1423 = vtanh.pop %v1422
    %v1424 = vmul.f32 %v1419, %v1423
    %v1425 = vld [vmem:[#allocation7] sm:$0xff]
    %v1426 = vld [vmem:[#allocation7 + $0x8] sm:$0xff]
    %v1427 = vld [vmem:[#allocation7 + $0x10] sm:$0xff]
    %v1428 = vld [vmem:[#allocation7 + $0x18] sm:$0xff]
    %v1429 = vld [vmem:[#allocation7 + $0x20] sm:$0xff]
    %v1430 = vld [vmem:[#allocation7 + $0x28] sm:$0xff]
    %v1431 = vld [vmem:[#allocation7 + $0x30] sm:$0xff]
    %v1432 = vld [vmem:[#allocation7 + $0x38] sm:$0xff]
    %v1433 = vld [vmem:[%s5] sm:$0xf]
    %v1435 = vlaneseq
    %v1436 = vshrl.u32 %v1435, 7
    %v1437 = vsub.s32 0, %v1436
    %v1438 = vrot.slane %v1433, %v1437
    %v1439 = vlaneseq
    %v1440 = vshrl.u32 %v1439, 7
    %v1441 = vsub.s32 2, %v1440
    %v1442 = vrot.slane %v1433, %v1441
    %v1443 = vlaneseq
    %v1444 = vshrl.u32 %v1443, 7
    %v1445 = vsub.s32 3, %v1444
    %v1446 = vrot.slane %v1433, %v1445
    %v1458 = vunpack.c.l.b16 %v1425
    %v1459 = vunpack.c.h.b16 %v1425
    %v1460 = vunpack.c.l.b16 %v1426
    %v1461 = vunpack.c.h.b16 %v1426
    %v1462 = vunpack.c.l.b16 %v1427
    %v1463 = vunpack.c.h.b16 %v1427
    %v1464 = vunpack.c.l.b16 %v1428
    %v1465 = vunpack.c.h.b16 %v1428
    %v1466 = vunpack.c.l.b16 %v1429
    %v1467 = vunpack.c.h.b16 %v1429
    %v1468 = vunpack.c.l.b16 %v1430
    %v1469 = vunpack.c.h.b16 %v1430
    %v1470 = vunpack.c.l.b16 %v1431
    %v1471 = vunpack.c.h.b16 %v1431
    %v1472 = vunpack.c.l.b16 %v1432
    %v1473 = vunpack.c.h.b16 %v1432
    %v1474 = vpack.c.b16 %v1462, %v1458
    %v1475 = vpack.c.b16 %v1463, %v1459
    %v1476 = vpack.c.b16 %v1464, %v1460
    %v1477 = vpack.c.b16 %v1465, %v1461
    %v1478 = vpack.c.b16 %v1470, %v1466
    %v1479 = vpack.c.b16 %v1471, %v1467
    %v1480 = vpack.c.b16 %v1472, %v1468
    %v1481 = vpack.c.b16 %v1473, %v1469
    %v1491 = vsel %vm187, %v96, 0
    %1493 = vmatprep.subr.bf16.mxu0 0
    %1494 = vmatpush1.bf16.msra.mxu0 0
    %1495 = vmatprep.subr.bf16.mxu0 0
    %1496 = vmatpush1.bf16.msra.mxu0 0
    %1497 = vmatprep.subr.bf16.mxu0 0
    %1498 = vmatpush1.bf16.msra.mxu0 0
    %1499 = vmatprep.subr.bf16.mxu0 0
    %1500 = vmatpush1.bf16.msra.mxu0 0
    %1501 = vmatprep.subr.bf16.mxu0 0
    %1502 = vmatpush1.bf16.msra.mxu0 0
    %1503 = vmatprep.subr.bf16.mxu0 0
    %1504 = vmatpush1.bf16.msra.mxu0 0
    %1505 = vmatprep.subr.bf16.mxu0 %v1479
    %1506 = vmatpush1.bf16.msra.mxu0 %v1478
    %1507 = vmatprep.subr.bf16.mxu0 %v1475
    %1508 = vmatpush1.bf16.msra.mxu0 %v1474
    %1509 = vmatprep.subr.bf16.mxu0 0
    %1510 = vmatpush2.bf16.msra.mxu0 0
    %1511 = vmatprep.subr.bf16.mxu0 0
    %1512 = vmatpush2.bf16.msra.mxu0 0
    %1513 = vmatprep.subr.bf16.mxu0 0
    %1514 = vmatpush2.bf16.msra.mxu0 0
    %1515 = vmatprep.subr.bf16.mxu0 0
    %1516 = vmatpush2.bf16.msra.mxu0 0
    %1517 = vmatprep.subr.bf16.mxu0 0
    %1518 = vmatpush2.bf16.msra.mxu0 0
    %1519 = vmatprep.subr.bf16.mxu0 0
    %1520 = vmatpush2.bf16.msra.mxu0 0
    %1521 = vmatprep.subr.bf16.mxu0 0
    %1522 = vmatpush2.bf16.msra.mxu0 0
    %1523 = vmatprep.subr.bf16.mxu0 0
    %1524 = vmatpush2.bf16.msra.mxu0 0
    %1525 = vmatprep.mubr.bf16.mxu0 0
    %1526 = vmatmul.mubr.bf16.gmra.mxu0 %v1491
    %v1527 = vpop.f32.mrf.mxu0
    %v1528 = vadd.f32 %v1438, %v1527
    %v1529 = vpop.f32.mrf.mxu0
    %v1530 = vpop.f32.mrf.mxu0
    %v1531 = vpop.f32.mrf.mxu0
    %1532 = vdwg.mxu0
    %1533 = vmatprep.subr.bf16.mxu0 0
    %1534 = vmatpush1.bf16.msra.mxu0 0
    %1535 = vmatprep.subr.bf16.mxu0 0
    %1536 = vmatpush1.bf16.msra.mxu0 0
    %1537 = vmatprep.subr.bf16.mxu0 0
    %1538 = vmatpush1.bf16.msra.mxu0 0
    %1539 = vmatprep.subr.bf16.mxu0 0
    %1540 = vmatpush1.bf16.msra.mxu0 0
    %1541 = vmatprep.subr.bf16.mxu0 0
    %1542 = vmatpush1.bf16.msra.mxu0 0
    %1543 = vmatprep.subr.bf16.mxu0 0
    %1544 = vmatpush1.bf16.msra.mxu0 0
    %1545 = vmatprep.subr.bf16.mxu0 %v1481
    %1546 = vmatpush1.bf16.msra.mxu0 %v1480
    %1547 = vmatprep.subr.bf16.mxu0 %v1477
    %1548 = vmatpush1.bf16.msra.mxu0 %v1476
    %1549 = vmatprep.subr.bf16.mxu0 0
    %1550 = vmatpush2.bf16.msra.mxu0 0
    %1551 = vmatprep.subr.bf16.mxu0 0
    %1552 = vmatpush2.bf16.msra.mxu0 0
    %1553 = vmatprep.subr.bf16.mxu0 0
    %1554 = vmatpush2.bf16.msra.mxu0 0
    %1555 = vmatprep.subr.bf16.mxu0 0
    %1556 = vmatpush2.bf16.msra.mxu0 0
    %1557 = vmatprep.subr.bf16.mxu0 0
    %1558 = vmatpush2.bf16.msra.mxu0 0
    %1559 = vmatprep.subr.bf16.mxu0 0
    %1560 = vmatpush2.bf16.msra.mxu0 0
    %1561 = vmatprep.subr.bf16.mxu0 0
    %1562 = vmatpush2.bf16.msra.mxu0 0
    %1563 = vmatprep.subr.bf16.mxu0 0
    %1564 = vmatpush2.bf16.msra.mxu0 0
    %1565 = vmatprep.mubr.bf16.mxu0 0
    %1566 = vmatmul.mubr.bf16.gmra.mxu0 %v1491
    %v1567 = vpop.f32.mrf.mxu0
    %v1568 = vadd.f32 %v1442, %v1567
    %v1569 = vpop.f32.mrf.mxu0
    %v1570 = vadd.f32 %v1446, %v1569
    %v1571 = vpop.f32.mrf.mxu0
    %v1572 = vpop.f32.mrf.mxu0
    %1573 = vdwg.mxu0
    %v1574 = vxor.u32 %v1528, 2147483648
    %v1575 = vmul.f32 %v1574, 1.442695
    %v1576 = vpow.pop %v1575
    %v1577 = vadd.f32 %v1576, 1.0
    %v1578 = vrcp.pop %v1577
    %v1579 = vmul.f32 1.0, %v1578
    %v1580 = vtanh.pop %v1568
    %v1581 = vxor.u32 %v1570, 2147483648
    %v1582 = vmul.f32 %v1581, 1.442695
    %v1583 = vpow.pop %v1582
    %v1584 = vadd.f32 %v1583, 1.0
    %v1585 = vrcp.pop %v1584
    %v1586 = vmul.f32 1.0, %v1585
    %v1587 = vmul.f32 %v1579, %v1580
    %v1588 = vtanh.pop %v1587
    %v1589 = vmul.f32 %v1586, %v1588
    %v1590 = vpack.c.bf16 %v1424, %v1424
    %v1591 = vpack.c.bf16 %v1589, %v1589
    %v1592 = vld [vmem:[#allocation8] sm:$0xf]
    %v1593 = vld [vmem:[#allocation8 + $0x4] sm:$0xf]
    %v1594 = vld [vmem:[#allocation8 + $0x8] sm:$0xf]
    %v1595 = vld [vmem:[#allocation8 + $0xc] sm:$0xf]
    %v1596 = vld [vmem:[#allocation8 + $0x10] sm:$0xf]
    %v1597 = vld [vmem:[#allocation8 + $0x14] sm:$0xf]
    %v1598 = vld [vmem:[#allocation8 + $0x18] sm:$0xf]
    %v1599 = vld [vmem:[#allocation8 + $0x1c] sm:$0xf]
    %v1600 = vld [vmem:[#allocation8 + $0x20] sm:$0xf]
    %v1601 = vld [vmem:[#allocation8 + $0x24] sm:$0xf]
    %v1602 = vld [vmem:[#allocation8 + $0x28] sm:$0xf]
    %v1603 = vld [vmem:[#allocation8 + $0x2c] sm:$0xf]
    %v1604 = vld [vmem:[#allocation8 + $0x30] sm:$0xf]
    %v1605 = vld [vmem:[#allocation8 + $0x34] sm:$0xf]
    %v1606 = vld [vmem:[#allocation8 + $0x38] sm:$0xf]
    %v1607 = vld [vmem:[#allocation8 + $0x3c] sm:$0xf]
    %v1608 = vld [vmem:[#allocation8 + $0x40] sm:$0xf]
    %v1609 = vld [vmem:[#allocation8 + $0x44] sm:$0xf]
    %v1610 = vld [vmem:[#allocation8 + $0x48] sm:$0xf]
    %v1611 = vld [vmem:[#allocation8 + $0x4c] sm:$0xf]
    %v1612 = vld [vmem:[#allocation8 + $0x50] sm:$0xf]
    %v1613 = vld [vmem:[#allocation8 + $0x54] sm:$0xf]
    %v1614 = vld [vmem:[#allocation8 + $0x58] sm:$0xf]
    %v1615 = vld [vmem:[#allocation8 + $0x5c] sm:$0xf]
    %v1616 = vld [vmem:[#allocation8 + $0x60] sm:$0xf]
    %v1617 = vld [vmem:[#allocation8 + $0x64] sm:$0xf]
    %v1618 = vld [vmem:[#allocation8 + $0x68] sm:$0xf]
    %v1619 = vld [vmem:[#allocation8 + $0x6c] sm:$0xf]
    %v1620 = vld [vmem:[#allocation8 + $0x70] sm:$0xf]
    %v1621 = vld [vmem:[#allocation8 + $0x74] sm:$0xf]
    %v1622 = vld [vmem:[#allocation8 + $0x78] sm:$0xf]
    %v1623 = vld [vmem:[#allocation8 + $0x7c] sm:$0xf]
    %v1624 = vld [vmem:[%s7] sm:$0x1]
    %v1626 = vlaneseq
    %v1627 = vshrl.u32 %v1626, 7
    %v1628 = vsub.s32 0, %v1627
    %v1629 = vrot.slane %v1624, %v1628
    %v1663 = vunpack.c.l.b16 %v1592
    %v1664 = vunpack.c.l.b16 %v1593
    %v1665 = vunpack.c.l.b16 %v1594
    %v1666 = vunpack.c.l.b16 %v1595
    %v1667 = vunpack.c.l.b16 %v1596
    %v1668 = vunpack.c.l.b16 %v1597
    %v1669 = vunpack.c.l.b16 %v1598
    %v1670 = vunpack.c.l.b16 %v1599
    %v1671 = vunpack.c.l.b16 %v1600
    %v1672 = vunpack.c.l.b16 %v1601
    %v1673 = vunpack.c.l.b16 %v1602
    %v1674 = vunpack.c.l.b16 %v1603
    %v1675 = vunpack.c.l.b16 %v1604
    %v1676 = vunpack.c.l.b16 %v1605
    %v1677 = vunpack.c.l.b16 %v1606
    %v1678 = vunpack.c.l.b16 %v1607
    %v1679 = vunpack.c.l.b16 %v1608
    %v1680 = vunpack.c.l.b16 %v1609
    %v1681 = vunpack.c.l.b16 %v1610
    %v1682 = vunpack.c.l.b16 %v1611
    %v1683 = vunpack.c.l.b16 %v1612
    %v1684 = vunpack.c.l.b16 %v1613
    %v1685 = vunpack.c.l.b16 %v1614
    %v1686 = vunpack.c.l.b16 %v1615
    %v1687 = vunpack.c.l.b16 %v1616
    %v1688 = vunpack.c.l.b16 %v1617
    %v1689 = vunpack.c.l.b16 %v1618
    %v1690 = vunpack.c.l.b16 %v1619
    %v1691 = vunpack.c.l.b16 %v1620
    %v1692 = vunpack.c.l.b16 %v1621
    %v1693 = vunpack.c.l.b16 %v1622
    %v1694 = vunpack.c.l.b16 %v1623
    %v1695 = vpack.c.b16 %v1664, %v1663
    %v1696 = vpack.c.b16 %v1666, %v1665
    %v1697 = vpack.c.b16 %v1668, %v1667
    %v1698 = vpack.c.b16 %v1670, %v1669
    %v1699 = vpack.c.b16 %v1672, %v1671
    %v1700 = vpack.c.b16 %v1674, %v1673
    %v1701 = vpack.c.b16 %v1676, %v1675
    %v1702 = vpack.c.b16 %v1678, %v1677
    %v1703 = vpack.c.b16 %v1680, %v1679
    %v1704 = vpack.c.b16 %v1682, %v1681
    %v1705 = vpack.c.b16 %v1684, %v1683
    %v1706 = vpack.c.b16 %v1686, %v1685
    %v1707 = vpack.c.b16 %v1688, %v1687
    %v1708 = vpack.c.b16 %v1690, %v1689
    %v1709 = vpack.c.b16 %v1692, %v1691
    %v1710 = vpack.c.b16 %v1694, %v1693
    %1727 = vmatprep.subr.bf16.mxu0 0
    %1728 = vmatpush1.bf16.msra.mxu0 %v1702
    %1729 = vmatprep.subr.bf16.mxu0 0
    %1730 = vmatpush1.bf16.msra.mxu0 %v1701
    %1731 = vmatprep.subr.bf16.mxu0 0
    %1732 = vmatpush1.bf16.msra.mxu0 %v1700
    %1733 = vmatprep.subr.bf16.mxu0 0
    %1734 = vmatpush1.bf16.msra.mxu0 %v1699
    %1735 = vmatprep.subr.bf16.mxu0 0
    %1736 = vmatpush1.bf16.msra.mxu0 %v1698
    %1737 = vmatprep.subr.bf16.mxu0 0
    %1738 = vmatpush1.bf16.msra.mxu0 %v1697
    %1739 = vmatprep.subr.bf16.mxu0 0
    %1740 = vmatpush1.bf16.msra.mxu0 %v1696
    %1741 = vmatprep.subr.bf16.mxu0 0
    %1742 = vmatpush1.bf16.msra.mxu0 %v1695
    %1743 = vmatprep.subr.bf16.mxu0 0
    %1744 = vmatpush2.bf16.msra.mxu0 %v1710
    %1745 = vmatprep.subr.bf16.mxu0 0
    %1746 = vmatpush2.bf16.msra.mxu0 %v1709
    %1747 = vmatprep.subr.bf16.mxu0 0
    %1748 = vmatpush2.bf16.msra.mxu0 %v1708
    %1749 = vmatprep.subr.bf16.mxu0 0
    %1750 = vmatpush2.bf16.msra.mxu0 %v1707
    %1751 = vmatprep.subr.bf16.mxu0 0
    %1752 = vmatpush2.bf16.msra.mxu0 %v1706
    %1753 = vmatprep.subr.bf16.mxu0 0
    %1754 = vmatpush2.bf16.msra.mxu0 %v1705
    %1755 = vmatprep.subr.bf16.mxu0 0
    %1756 = vmatpush2.bf16.msra.mxu0 %v1704
    %1757 = vmatprep.subr.bf16.mxu0 0
    %1758 = vmatpush2.bf16.msra.mxu0 %v1703
    %1759 = vmatprep.mubr.bf16.mxu0 %v1591
    %1760 = vmatmul.mubr.bf16.gmra.mxu0 %v1590
    %v1761 = vpop.f32.mrf.mxu0
    %v1762 = vadd.f32 %v1629, %v1761
    %v1763 = vpop.f32.mrf.mxu0
    %v1764 = vpop.f32.mrf.mxu0
    %v1765 = vpop.f32.mrf.mxu0
    %1766 = vdwg.mxu0
    %1767 = vmax.xlane.f32.xlu0 %v1762
    %v1768 = vpop.xlane.xlu0 %1767
    %v1769 = vsub.f32 %v1762, %v1768
    %v1770 = vmul.f32 %v1769, 1.442695
    %v1771 = vpow.pop %v1770
    %1772 = vadd.xlane.f32.xlu0 %v1771
    %v1773 = vpop.xlane.xlu0 %1772
    %v1774 = vrcp.pop %v1773
    %v1775 = vmul.f32 %v1771, %v1774
    %1776 = vst [vmem:[#allocation10] sm:$0xff] %v1775
    %v1777 = vlog2.pop %v1773
    %v1778 = vmul.f32 %v1777, 0.6931472
    %v1779 = vsub.f32 %v1769, %v1778
    %1780 = vst [vmem:[#allocation11] sm:$0xff] %v1779
    // Predicated region
    $region50: #{tpu_custom_call.1} parent=1 // pred_check
      _
    $region51: #{tpu_custom_call.1} parent=1 // pred_check_branch
      %1782 = sbr.rel (0) target = $region53
    $region52: #{tpu_custom_call.1} parent=1 // pred_region
      %s1784 = ssub.s32 128, 128
      %1785 = vsyncadd [#allocation4], %s1784
      %s1787 = sshll.u32 [#allocation10], 4
      %s1788 = int_to_ptr.vmem [resolvable:$true] %s1787
      %1790 = dma.vmem_to_hbm [thread:$0]  %s1788, 128, %s8, [#allocation4]
    $region53: #{tpu_custom_call.1} parent=1 // pred_fallthru
      _
    // Predicated region
    $region54: #{tpu_custom_call.1} parent=1 // pred_check
      _
    $region55: #{tpu_custom_call.1} parent=1 // pred_check_branch
      %1792 = sbr.rel (0) target = $region57
    $region56: #{tpu_custom_call.1} parent=1 // pred_region
      %s1794 = ssub.s32 128, 128
      %1795 = vsyncadd [#allocation12], %s1794
      %s1797 = sshll.u32 [#allocation11], 4
      %s1798 = int_to_ptr.vmem [resolvable:$true] %s1797
      %1800 = dma.vmem_to_hbm [thread:$0]  %s1798, 128, %s9, [#allocation12]
    $region57: #{tpu_custom_call.1} parent=1 // pred_fallthru
      _
    // Predicated region
    $region58: #{tpu_custom_call.1} parent=1 // pred_check
      _
    $region59: #{tpu_custom_call.1} parent=1 // pred_check_branch
      %1802 = sbr.rel (0) target = $region61
    $region60: #{tpu_custom_call.1} parent=1 // pred_region
      %1803 = dma.done [#allocation4], 128
    $region61: #{tpu_custom_call.1} parent=1 // pred_fallthru
      _
    // Predicated region
    $region62: #{tpu_custom_call.1} parent=1 // pred_check
      _
    $region63: #{tpu_custom_call.1} parent=1 // pred_check_branch
      %1805 = sbr.rel (0) target = $region65
    $region64: #{tpu_custom_call.1} parent=1 // pred_region
      %1806 = dma.done [#allocation12], 128
    $region65: #{tpu_custom_call.1} parent=1 // pred_fallthru
      _
    %1807 = vsyncpa [#allocation3], 1
    %1808 = vsyncpa [#allocation6], 1
    %1809 = vsyncpa [#allocation9], 1
    %1810 = vsyncpa [#allocation4], 1
    %1811 = vsyncpa [#allocation12], 1

</llo_original>
